<compile_context>
chip_gen: v7x
topology: tpu7x:2x2x1
jax: 0.10.0
libtpu: 0.0.40
codegen_flags: <defaults>
</compile_context>

<pallas_src>
import functools

import jax
import jax.numpy as jnp
from jax.experimental import pallas as pl
from jax.experimental.pallas import tpu as pltpu

LEAKY_SLOPE = 0.2


def _round_up(x, m):
    return (x + m - 1) // m * m


# ------------------------------- Pallas kernel -----------------------------------------
def _blur_embedding_kernel(x_ref, w0_ref, wr_ref, b_ref, o_ref, *, num_layers, slope):
    """Fused MLP.

    x_ref  : (TM, in_c)            f32   — row tile (pipelined over the grid)
    w0_ref : (in_c, D_pad)         f32   — layer-0 weight (in_c is tiny -> VPU path)
    wr_ref : (max(L-1,1), D, D)    bf16  — layers 1..L-1 weights, VMEM-resident
    b_ref  : (L, 1, D_pad)         f32   — all biases
    o_ref  : (TM, D_pad)           f32   — lane-dense output tile
    """
    in_c = x_ref.shape[-1]
    x = x_ref[...].astype(jnp.float32)          # (TM, in_c)
    w0 = w0_ref[...]                            # (in_c, D)

    # ---- layer 0: VPU outer-product MAC (K=in_c is tiny; an MXU matmul would reduce
    #      over 127/128 zeros). Unrolled over in_c.
    y = x[:, 0:1] * w0[0:1, :]
    for k in range(1, in_c):
        y = y + x[:, k:k + 1] * w0[k:k + 1, :]
    y = y + b_ref[0]
    h = jnp.maximum(y, slope * y)               # LeakyReLU(0.2), max form
    h = h.astype(jnp.bfloat16)                  # carry activations in bf16

    # ---- layers 1 .. L-1: bf16 MXU matmul, f32 accumulate, f32 epilogue.
    for i in range(num_layers - 1):
        y = jnp.dot(h, wr_ref[i], preferred_element_type=jnp.float32)
        y = y + b_ref[i + 1]
        y = jnp.maximum(y, slope * y)
        h = y.astype(jnp.bfloat16)

    o_ref[...] = y.astype(jnp.float32) if num_layers > 1 else h.astype(jnp.float32)


# ------------------------------- one-time parameter packing -----------------------------
def pack_blur_embedding_params(weights, biases):
    """Pack torch-layout Linear params once (NOT in the per-call forward path).

    weights : list of (out_features, in_features) f32
    biases  : list of (out_features,) f32
    returns : (w0, w_rest, b_stack, out_channels)
    """
    num_layers = len(weights)
    out_c, in_c = weights[0].shape
    d_pad = _round_up(out_c, 128)

    w0 = jnp.zeros((in_c, d_pad), jnp.float32)
    w0 = w0.at[:, :out_c].set(jnp.asarray(weights[0]).T.astype(jnp.float32))

    w_rest = jnp.zeros((max(num_layers - 1, 1), d_pad, d_pad), jnp.bfloat16)
    for i in range(1, num_layers):
        w_rest = w_rest.at[i - 1, :out_c, :out_c].set(
            jnp.asarray(weights[i]).T.astype(jnp.bfloat16))

    b_stack = jnp.zeros((num_layers, 1, d_pad), jnp.float32)
    for i, b in enumerate(biases):
        b_stack = b_stack.at[i, 0, :out_c].set(jnp.asarray(b).astype(jnp.float32))

    return w0, w_rest, b_stack, out_c


# ------------------------------- forward ------------------------------------------------
def blur_embedding_fwd(x, w0, w_rest, b_stack, *, out_channels, block_rows=256):
    """BlurEmbedding.forward on pre-packed params.

    x : (B, in_channels) f32  ->  (B, out_channels) f32
    """
    B, in_c = x.shape
    num_layers = b_stack.shape[0]
    d_pad = b_stack.shape[-1]

    tm = min(block_rows, _round_up(B, 8))       # don't over-tile tiny batches
    b_pad = _round_up(B, tm)

    x = x.astype(jnp.float32)
    if b_pad != B:
        x = jnp.zeros((b_pad, in_c), jnp.float32).at[:B].set(x)

    cost = pl.CostEstimate(
        flops=2 * b_pad * in_c * d_pad
              + 2 * b_pad * d_pad * d_pad * max(num_layers - 1, 0)
              + 3 * b_pad * d_pad * num_layers,
        transcendentals=0,
        bytes_accessed=(b_pad * in_c * 4 + w0.size * 4 + w_rest.size * 2
                        + b_stack.size * 4 + b_pad * d_pad * 4),
    )

    out = pl.pallas_call(
        functools.partial(_blur_embedding_kernel,
                          num_layers=num_layers, slope=LEAKY_SLOPE),
        out_shape=jax.ShapeDtypeStruct((b_pad, d_pad), jnp.float32),
        grid=(b_pad // tm,),
        in_specs=[
            pl.BlockSpec((tm, in_c), lambda i: (i, 0)),              # X row tile
            pl.BlockSpec(w0.shape, lambda i: (0, 0)),                # layer-0 W (resident)
            pl.BlockSpec(w_rest.shape, lambda i: (0, 0, 0)),         # W stack   (resident)
            pl.BlockSpec(b_stack.shape, lambda i: (0, 0, 0)),        # biases    (resident)
        ],
        out_specs=pl.BlockSpec((tm, d_pad), lambda i: (i, 0)),       # lane-dense output
        compiler_params=pltpu.CompilerParams(
            dimension_semantics=("parallel",),      # megacore-shardable on v7x (grid>=2)
            vmem_limit_bytes=32 * 1024 * 1024,      # portable across v5e/v6e/v7x
        ),
        cost_estimate=cost,
    )(x, w0, w_rest, b_stack)

    return out[:B, :out_channels]


# ------------------------------- pure-JAX references ------------------------------------
def blur_embedding_ref_matched(x, weights, biases):
    """Same numerics as the kernel (bf16 weights/activations for layers >= 1)."""
    h = x.astype(jnp.float32)
    for i, (w, b) in enumerate(zip(weights, biases)):
        if i == 0:
            y = jnp.dot(h, w.T.astype(jnp.float32)) + b.astype(jnp.float32)
        else:
            y = jnp.dot(h.astype(jnp.bfloat16), w.T.astype(jnp.bfloat16),
                        preferred_element_type=jnp.float32) + b.astype(jnp.float32)
        y = jnp.maximum(y, LEAKY_SLOPE * y)
        h = y.astype(jnp.bfloat16).astype(jnp.float32) if i < len(weights) - 1 else y
    return h


def blur_embedding_ref_f32(x, weights, biases):
    """Full-f32 reference (matches the original PyTorch module's math)."""
    h = x.astype(jnp.float32)
    for w, b in zip(weights, biases):
        y = jnp.dot(h, w.T) + b
        h = jnp.where(y >= 0.0, y, LEAKY_SLOPE * y)
    return h


# ------------------------------- demo ----------------------------------------------------
if __name__ == "__main__":
    IN_CHANNELS, OUT_CHANNELS, BLOCK_NUM = 1, 64, 6
    BATCH = 512  # two TM=256 row tiles -> real grid, both v7x TCs busy

    key = jax.random.PRNGKey(0)
    keys = jax.random.split(key, 2 * BLOCK_NUM + 1)

    weights, biases = [], []
    fan_in = IN_CHANNELS
    for i in range(BLOCK_NUM):
        w = jax.random.normal(keys[2 * i], (OUT_CHANNELS, fan_in),
                              jnp.float32) / jnp.sqrt(float(fan_in))
        b = 0.01 * jax.random.normal(keys[2 * i + 1], (OUT_CHANNELS,), jnp.float32)
        weights.append(w)
        biases.append(b)
        fan_in = OUT_CHANNELS

    x = jax.random.uniform(keys[-1], (BATCH, IN_CHANNELS), jnp.float32)

    # Pack once ("model init") — NOT part of the per-call forward path.
    w0, w_rest, b_stack, out_c = pack_blur_embedding_params(weights, biases)

    fwd = jax.jit(functools.partial(blur_embedding_fwd,
                                    out_channels=out_c, block_rows=256))
    out = jax.block_until_ready(fwd(x, w0, w_rest, b_stack))

    ref_m = jax.block_until_ready(jax.jit(blur_embedding_ref_matched)(x, weights, biases))
    ref_f = jax.block_until_ready(jax.jit(blur_embedding_ref_f32)(x, weights, biases))

    assert out.shape == (BATCH, OUT_CHANNELS), out.shape
    assert bool(jnp.all(jnp.isfinite(out)))
    err_matched = float(jnp.max(jnp.abs(out - ref_m)))
    assert err_matched < 2e-3, f"mismatch vs numerics-matched reference: {err_matched}"
    scale = float(jnp.max(jnp.abs(ref_f))) + 1e-6
    err_f32 = float(jnp.max(jnp.abs(out - ref_f))) / scale
    assert err_f32 < 5e-2, f"mismatch vs f32 (torch-like) reference: {err_f32}"
    print("KERNEL_OK")
</pallas_src>

<mosaic_0001>
module attributes {stable_mosaic.version = 11 : i64} {
  func.func @_blur_embedding_kernel(%arg0: i32, %arg1: memref<256x1xf32, #tpu.memory_space<vmem>>, %arg2: memref<1x128xf32, #tpu.memory_space<vmem>>, %arg3: memref<5x128x128xbf16, #tpu.memory_space<vmem>>, %arg4: memref<6x1x128xf32, #tpu.memory_space<vmem>>, %arg5: memref<256x128xf32, #tpu.memory_space<vmem>>) attributes {dimension_semantics = [#tpu.dimension_semantics<parallel>], iteration_bounds = array<i64: 2>, scalar_prefetch = 0 : i64, scratch_operands = 0 : i64, tpu.core_type = #tpu.core_type<tc>, window_params = [{transform_indices = @transform_0, window_bounds = array<i64: 256, 1>}, {pipeline_mode = #tpu.pipeline_mode<synchronous>, transform_indices = @transform_1, window_bounds = array<i64: 1, 128>}, {pipeline_mode = #tpu.pipeline_mode<synchronous>, transform_indices = @transform_2, window_bounds = array<i64: 5, 128, 128>}, {pipeline_mode = #tpu.pipeline_mode<synchronous>, transform_indices = @transform_3, window_bounds = array<i64: 6, 1, 128>}, {transform_indices = @transform_4, window_bounds = array<i64: 256, 128>}]} {
    %c0 = arith.constant 0 : index
    %c0_0 = arith.constant 0 : index
    %0 = vector.load %arg1[%c0, %c0_0] : memref<256x1xf32, #tpu.memory_space<vmem>>, vector<256x1xf32>
    %c0_1 = arith.constant 0 : index
    %c0_2 = arith.constant 0 : index
    %1 = vector.load %arg2[%c0_1, %c0_2] : memref<1x128xf32, #tpu.memory_space<vmem>>, vector<1x128xf32>
    %2 = vector.broadcast %0 : vector<256x1xf32> to vector<256x128xf32>
    %3 = vector.broadcast %1 : vector<1x128xf32> to vector<256x128xf32>
    %4 = arith.mulf %2, %3 : vector<256x128xf32>
    %c0_3 = arith.constant 0 : index
    %c0_4 = arith.constant 0 : index
    %c0_5 = arith.constant 0 : index
    %5 = vector.load %arg4[%c0_3, %c0_4, %c0_5] : memref<6x1x128xf32, #tpu.memory_space<vmem>>, vector<1x1x128xf32>
    %6 = vector.shape_cast %5 : vector<1x1x128xf32> to vector<1x128xf32>
    %7 = vector.broadcast %6 : vector<1x128xf32> to vector<256x128xf32>
    %8 = arith.addf %4, %7 : vector<256x128xf32>
    %cst = arith.constant 2.000000e-01 : f32
    %9 = vector.broadcast %cst : f32 to vector<256x128xf32>
    %10 = arith.mulf %9, %8 : vector<256x128xf32>
    %11 = arith.maximumf %8, %10 : vector<256x128xf32>
    %12 = arith.truncf %11 : vector<256x128xf32> to vector<256x128xbf16>
    %c0_6 = arith.constant 0 : index
    %c0_7 = arith.constant 0 : index
    %c0_8 = arith.constant 0 : index
    %13 = vector.load %arg3[%c0_6, %c0_7, %c0_8] : memref<5x128x128xbf16, #tpu.memory_space<vmem>>, vector<1x128x128xbf16>
    %14 = vector.shape_cast %13 : vector<1x128x128xbf16> to vector<128x128xbf16>
    %cst_9 = arith.constant dense<0.000000e+00> : vector<256x128xf32>
    %15 = tpu.matmul %12, %14, %cst_9 {dimension_numbers = #tpu.dot_dimension_numbers<[1], [0], [0], [1], [0, 0, 1, 1], [], []>} : vector<256x128xbf16>, vector<128x128xbf16>, vector<256x128xf32> -> vector<256x128xf32>
    %c1 = arith.constant 1 : index
    %c0_10 = arith.constant 0 : index
    %c0_11 = arith.constant 0 : index
    %16 = vector.load %arg4[%c1, %c0_10, %c0_11] : memref<6x1x128xf32, #tpu.memory_space<vmem>>, vector<1x1x128xf32>
    %17 = vector.shape_cast %16 : vector<1x1x128xf32> to vector<1x128xf32>
    %18 = vector.broadcast %17 : vector<1x128xf32> to vector<256x128xf32>
    %19 = arith.addf %15, %18 : vector<256x128xf32>
    %cst_12 = arith.constant 2.000000e-01 : f32
    %20 = vector.broadcast %cst_12 : f32 to vector<256x128xf32>
    %21 = arith.mulf %20, %19 : vector<256x128xf32>
    %22 = arith.maximumf %19, %21 : vector<256x128xf32>
    %23 = arith.truncf %22 : vector<256x128xf32> to vector<256x128xbf16>
    %c1_13 = arith.constant 1 : index
    %c0_14 = arith.constant 0 : index
    %c0_15 = arith.constant 0 : index
    %24 = vector.load %arg3[%c1_13, %c0_14, %c0_15] : memref<5x128x128xbf16, #tpu.memory_space<vmem>>, vector<1x128x128xbf16>
    %25 = vector.shape_cast %24 : vector<1x128x128xbf16> to vector<128x128xbf16>
    %cst_16 = arith.constant dense<0.000000e+00> : vector<256x128xf32>
    %26 = tpu.matmul %23, %25, %cst_16 {dimension_numbers = #tpu.dot_dimension_numbers<[1], [0], [0], [1], [0, 0, 1, 1], [], []>} : vector<256x128xbf16>, vector<128x128xbf16>, vector<256x128xf32> -> vector<256x128xf32>
    %c2 = arith.constant 2 : index
    %c0_17 = arith.constant 0 : index
    %c0_18 = arith.constant 0 : index
    %27 = vector.load %arg4[%c2, %c0_17, %c0_18] : memref<6x1x128xf32, #tpu.memory_space<vmem>>, vector<1x1x128xf32>
    %28 = vector.shape_cast %27 : vector<1x1x128xf32> to vector<1x128xf32>
    %29 = vector.broadcast %28 : vector<1x128xf32> to vector<256x128xf32>
    %30 = arith.addf %26, %29 : vector<256x128xf32>
    %cst_19 = arith.constant 2.000000e-01 : f32
    %31 = vector.broadcast %cst_19 : f32 to vector<256x128xf32>
    %32 = arith.mulf %31, %30 : vector<256x128xf32>
    %33 = arith.maximumf %30, %32 : vector<256x128xf32>
    %34 = arith.truncf %33 : vector<256x128xf32> to vector<256x128xbf16>
    %c2_20 = arith.constant 2 : index
    %c0_21 = arith.constant 0 : index
    %c0_22 = arith.constant 0 : index
    %35 = vector.load %arg3[%c2_20, %c0_21, %c0_22] : memref<5x128x128xbf16, #tpu.memory_space<vmem>>, vector<1x128x128xbf16>
    %36 = vector.shape_cast %35 : vector<1x128x128xbf16> to vector<128x128xbf16>
    %cst_23 = arith.constant dense<0.000000e+00> : vector<256x128xf32>
    %37 = tpu.matmul %34, %36, %cst_23 {dimension_numbers = #tpu.dot_dimension_numbers<[1], [0], [0], [1], [0, 0, 1, 1], [], []>} : vector<256x128xbf16>, vector<128x128xbf16>, vector<256x128xf32> -> vector<256x128xf32>
    %c3 = arith.constant 3 : index
    %c0_24 = arith.constant 0 : index
    %c0_25 = arith.constant 0 : index
    %38 = vector.load %arg4[%c3, %c0_24, %c0_25] : memref<6x1x128xf32, #tpu.memory_space<vmem>>, vector<1x1x128xf32>
    %39 = vector.shape_cast %38 : vector<1x1x128xf32> to vector<1x128xf32>
    %40 = vector.broadcast %39 : vector<1x128xf32> to vector<256x128xf32>
    %41 = arith.addf %37, %40 : vector<256x128xf32>
    %cst_26 = arith.constant 2.000000e-01 : f32
    %42 = vector.broadcast %cst_26 : f32 to vector<256x128xf32>
    %43 = arith.mulf %42, %41 : vector<256x128xf32>
    %44 = arith.maximumf %41, %43 : vector<256x128xf32>
    %45 = arith.truncf %44 : vector<256x128xf32> to vector<256x128xbf16>
    %c3_27 = arith.constant 3 : index
    %c0_28 = arith.constant 0 : index
    %c0_29 = arith.constant 0 : index
    %46 = vector.load %arg3[%c3_27, %c0_28, %c0_29] : memref<5x128x128xbf16, #tpu.memory_space<vmem>>, vector<1x128x128xbf16>
    %47 = vector.shape_cast %46 : vector<1x128x128xbf16> to vector<128x128xbf16>
    %cst_30 = arith.constant dense<0.000000e+00> : vector<256x128xf32>
    %48 = tpu.matmul %45, %47, %cst_30 {dimension_numbers = #tpu.dot_dimension_numbers<[1], [0], [0], [1], [0, 0, 1, 1], [], []>} : vector<256x128xbf16>, vector<128x128xbf16>, vector<256x128xf32> -> vector<256x128xf32>
    %c4 = arith.constant 4 : index
    %c0_31 = arith.constant 0 : index
    %c0_32 = arith.constant 0 : index
    %49 = vector.load %arg4[%c4, %c0_31, %c0_32] : memref<6x1x128xf32, #tpu.memory_space<vmem>>, vector<1x1x128xf32>
    %50 = vector.shape_cast %49 : vector<1x1x128xf32> to vector<1x128xf32>
    %51 = vector.broadcast %50 : vector<1x128xf32> to vector<256x128xf32>
    %52 = arith.addf %48, %51 : vector<256x128xf32>
    %cst_33 = arith.constant 2.000000e-01 : f32
    %53 = vector.broadcast %cst_33 : f32 to vector<256x128xf32>
    %54 = arith.mulf %53, %52 : vector<256x128xf32>
    %55 = arith.maximumf %52, %54 : vector<256x128xf32>
    %56 = arith.truncf %55 : vector<256x128xf32> to vector<256x128xbf16>
    %c4_34 = arith.constant 4 : index
    %c0_35 = arith.constant 0 : index
    %c0_36 = arith.constant 0 : index
    %57 = vector.load %arg3[%c4_34, %c0_35, %c0_36] : memref<5x128x128xbf16, #tpu.memory_space<vmem>>, vector<1x128x128xbf16>
    %58 = vector.shape_cast %57 : vector<1x128x128xbf16> to vector<128x128xbf16>
    %cst_37 = arith.constant dense<0.000000e+00> : vector<256x128xf32>
    %59 = tpu.matmul %56, %58, %cst_37 {dimension_numbers = #tpu.dot_dimension_numbers<[1], [0], [0], [1], [0, 0, 1, 1], [], []>} : vector<256x128xbf16>, vector<128x128xbf16>, vector<256x128xf32> -> vector<256x128xf32>
    %c5 = arith.constant 5 : index
    %c0_38 = arith.constant 0 : index
    %c0_39 = arith.constant 0 : index
    %60 = vector.load %arg4[%c5, %c0_38, %c0_39] : memref<6x1x128xf32, #tpu.memory_space<vmem>>, vector<1x1x128xf32>
    %61 = vector.shape_cast %60 : vector<1x1x128xf32> to vector<1x128xf32>
    %62 = vector.broadcast %61 : vector<1x128xf32> to vector<256x128xf32>
    %63 = arith.addf %59, %62 : vector<256x128xf32>
    %cst_40 = arith.constant 2.000000e-01 : f32
    %64 = vector.broadcast %cst_40 : f32 to vector<256x128xf32>
    %65 = arith.mulf %64, %63 : vector<256x128xf32>
    %66 = arith.maximumf %63, %65 : vector<256x128xf32>
    %c0_41 = arith.constant 0 : index
    %c0_42 = arith.constant 0 : index
    %67 = vector.load %arg5[%c0_41, %c0_42] : memref<256x128xf32, #tpu.memory_space<vmem>>, vector<256x128xf32>
    tpu.vector_store %arg5[%c0_41, %c0_42], %66 {strides = array<i32>} : memref<256x128xf32, #tpu.memory_space<vmem>>, vector<256x128xf32>,
    return
  }
  func.func @transform_0(%arg0: i32) -> (i32, i32) {
    %c0_i32 = arith.constant 0 : i32
    %c0_i32_0 = arith.constant 0 : i32
    return %arg0, %c0_i32 : i32, i32
  }
  func.func @transform_1(%arg0: i32) -> (i32, i32) {
    %c0_i32 = arith.constant 0 : i32
    %c0_i32_0 = arith.constant 0 : i32
    %c0_i32_1 = arith.constant 0 : i32
    return %c0_i32, %c0_i32_0 : i32, i32
  }
  func.func @transform_2(%arg0: i32) -> (i32, i32, i32) {
    %c0_i32 = arith.constant 0 : i32
    %c0_i32_0 = arith.constant 0 : i32
    %c0_i32_1 = arith.constant 0 : i32
    %c0_i32_2 = arith.constant 0 : i32
    return %c0_i32, %c0_i32_0, %c0_i32_1 : i32, i32, i32
  }
  func.func @transform_3(%arg0: i32) -> (i32, i32, i32) {
    %c0_i32 = arith.constant 0 : i32
    %c0_i32_0 = arith.constant 0 : i32
    %c0_i32_1 = arith.constant 0 : i32
    %c0_i32_2 = arith.constant 0 : i32
    return %c0_i32, %c0_i32_0, %c0_i32_1 : i32, i32, i32
  }
  func.func @transform_4(%arg0: i32) -> (i32, i32) {
    %c0_i32 = arith.constant 0 : i32
    %c0_i32_0 = arith.constant 0 : i32
    return %arg0, %c0_i32 : i32, i32
  }
}

</mosaic_0001>

<llo_original>
// kernel: blur_embedding_fwd.1
$region0: #{blur_embedding_fwd.1}
  #allocation0 [shape = 'u32[]', space=smem, size = 0x4, offset = 0x4, fixed_abs, tag = 'smem constant byte address 0x4 - core index']
  #allocation1 [shape = 'u32[144,128]{1,0:T(1,128)}', space=vmem, size = 0x12000, scoped, tag = 'internal scratch']
  %s0 = inlined_call_operand.vmem [shape: f32[512,1], index: 0, kind: input, shape index: {}]
  %s1 = inlined_call_operand.vmem [shape: f32[1,128], index: 1, kind: input, shape index: {}]
  %s2 = inlined_call_operand.vmem [shape: bf16[5,128,128], index: 2, kind: input, shape index: {}]
  %s3 = inlined_call_operand.vmem [shape: f32[6,1,128], index: 3, kind: input, shape index: {}]
  %s4 = inlined_call_operand.vmem [shape: f32[512,128], index: 4, kind: output, shape index: {}]
  %s5 = sld [smem:[#allocation0]]
  $region49: #{blur_embedding_fwd.1} parent=0
    _
  %s7 = ssub.s32 1, %s5
  %s8 = scalar_select 0, %s7, %s5
  loop: start=0, step=1, limit=4
  $region2: #{blur_embedding_fwd.1} parent=0 // loop_pre_header
    _
  $region3: #{blur_embedding_fwd.1} parent=0 // loop_header
    %s10 = sphi 0, %s14
    %p11 = scmp.ge.s32.totalorder %s10, 4
    %s20 = sphi 0, %s22
    %s23 = sphi 0, %s20
    %s24 = sphi 0, %s23
    %s40 = sphi 0, %s24
    %s44 = sphi 0, %s44
    %s46 = sphi 0, %s44
    %s47 = sphi 0, %s46
    %s61 = sphi 0, %s47
    %s65 = sphi 0, %s65
    %s67 = sphi 0, %s65
    %s68 = sphi 0, %s67
    %s82 = sphi 0, %s68
    %s86 = sphi 0, %s86
    %s88 = sphi 0, %s86
    %s89 = sphi 0, %s88
    %s103 = sphi 0, %s89
    %s109 = sphi 0, %s111
    %s112 = sphi 0, %s109
    %s113 = sphi 0, %s112
    %s129 = sphi 0, %s113
  $region4: #{blur_embedding_fwd.1} parent=0 // loop_header_branch
    %13 = sbr.rel (%p11) target = $region8
  $region5: #{blur_embedding_fwd.1} parent=0 // loop_body
    %s15 = ssub.s32 %s10, 1
    %s16 = ssub.s32 %s10, 2
    %s17 = sadd.s32 %s10, 1
    %s18 = ssub.s32 %s10, %s17
    %p19 = scmp.eq.s32.totalorder %s18, 0
    %s21 = sadd.s32 %s20, 1
    %s22 = scalar_select %p19, %s20, %s21
    %p25 = pneg %p19
    %p26 = scmp.eq.s32.totalorder %s10, 1
    %p27 = por %p25, %p26
    %p28 = scmp.ne.s32.totalorder %s20, %s23
    %p29 = scmp.eq.s32.totalorder %s10, 0
    %p30 = por %p28, %p29
    %p31 = scmp.ne.s32.totalorder %s20, %s23
    %p32 = scmp.eq.s32.totalorder %s15, 1
    %p33 = por %p31, %p32
    %p34 = scmp.ne.s32.totalorder %s23, %s24
    %p35 = scmp.eq.s32.totalorder %s15, 0
    %p36 = por %p34, %p35
    %p37 = scmp.ne.s32.totalorder %s23, %s24
    %p38 = scmp.eq.s32.totalorder %s16, 1
    %p39 = por %p37, %p38
    %p41 = scmp.ne.s32.totalorder %s24, %s40
    %p42 = scmp.eq.s32.totalorder %s16, 0
    %p43 = por %p41, %p42
    %s45 = sadd.s32 %s44, 1
    %p48 = scmp.eq.s32.totalorder %s10, 1
    %p49 = scmp.ne.s32.totalorder %s44, %s46
    %p50 = scmp.eq.s32.totalorder %s10, 0
    %p51 = por %p49, %p50
    %p52 = scmp.ne.s32.totalorder %s44, %s46
    %p53 = scmp.eq.s32.totalorder %s15, 1
    %p54 = por %p52, %p53
    %p55 = scmp.ne.s32.totalorder %s46, %s47
    %p56 = scmp.eq.s32.totalorder %s15, 0
    %p57 = por %p55, %p56
    %p58 = scmp.ne.s32.totalorder %s46, %s47
    %p59 = scmp.eq.s32.totalorder %s16, 1
    %p60 = por %p58, %p59
    %p62 = scmp.ne.s32.totalorder %s47, %s61
    %p63 = scmp.eq.s32.totalorder %s16, 0
    %p64 = por %p62, %p63
    %s66 = sadd.s32 %s65, 1
    %p69 = scmp.eq.s32.totalorder %s10, 1
    %p70 = scmp.ne.s32.totalorder %s65, %s67
    %p71 = scmp.eq.s32.totalorder %s10, 0
    %p72 = por %p70, %p71
    %p73 = scmp.ne.s32.totalorder %s65, %s67
    %p74 = scmp.eq.s32.totalorder %s15, 1
    %p75 = por %p73, %p74
    %p76 = scmp.ne.s32.totalorder %s67, %s68
    %p77 = scmp.eq.s32.totalorder %s15, 0
    %p78 = por %p76, %p77
    %p79 = scmp.ne.s32.totalorder %s67, %s68
    %p80 = scmp.eq.s32.totalorder %s16, 1
    %p81 = por %p79, %p80
    %p83 = scmp.ne.s32.totalorder %s68, %s82
    %p84 = scmp.eq.s32.totalorder %s16, 0
    %p85 = por %p83, %p84
    %s87 = sadd.s32 %s86, 1
    %p90 = scmp.eq.s32.totalorder %s10, 1
    %p91 = scmp.ne.s32.totalorder %s86, %s88
    %p92 = scmp.eq.s32.totalorder %s10, 0
    %p93 = por %p91, %p92
    %p94 = scmp.ne.s32.totalorder %s86, %s88
    %p95 = scmp.eq.s32.totalorder %s15, 1
    %p96 = por %p94, %p95
    %p97 = scmp.ne.s32.totalorder %s88, %s89
    %p98 = scmp.eq.s32.totalorder %s15, 0
    %p99 = por %p97, %p98
    %p100 = scmp.ne.s32.totalorder %s88, %s89
    %p101 = scmp.eq.s32.totalorder %s16, 1
    %p102 = por %p100, %p101
    %p104 = scmp.ne.s32.totalorder %s89, %s103
    %p105 = scmp.eq.s32.totalorder %s16, 0
    %p106 = por %p104, %p105
    %s107 = ssub.s32 %s10, %s17
    %p108 = scmp.eq.s32.totalorder %s107, 0
    %s110 = sadd.s32 %s109, 1
    %s111 = scalar_select %p108, %s109, %s110
    %p114 = pneg %p108
    %p115 = scmp.eq.s32.totalorder %s10, 1
    %p116 = por %p114, %p115
    %p117 = scmp.ne.s32.totalorder %s109, %s112
    %p118 = scmp.eq.s32.totalorder %s10, 0
    %p119 = por %p117, %p118
    %p120 = scmp.ne.s32.totalorder %s109, %s112
    %p121 = scmp.eq.s32.totalorder %s15, 1
    %p122 = por %p120, %p121
    %p123 = scmp.ne.s32.totalorder %s112, %s113
    %p124 = scmp.eq.s32.totalorder %s15, 0
    %p125 = por %p123, %p124
    %p126 = scmp.ne.s32.totalorder %s112, %s113
    %p127 = scmp.eq.s32.totalorder %s16, 1
    %p128 = por %p126, %p127
    %p130 = scmp.ne.s32.totalorder %s113, %s129
    %p131 = scmp.eq.s32.totalorder %s16, 0
    %p132 = por %p130, %p131
    %p133 = scmp.le.s32.totalorder 1, %s10
    %p134 = scmp.lt.s32.totalorder %s10, 3
    %p135 = pnand %p133, %p134
    %p136 = pneg %p135
    // Predicated region
    $region9: #{blur_embedding_fwd.1} parent=5 // pred_check
      _
    $region10: #{blur_embedding_fwd.1} parent=5 // pred_check_branch
      %138 = sbr.rel (%p135) target = $region12
    $region11: #{blur_embedding_fwd.1} parent=5 // pred_region
      %s139 = ssub.s32 %s10, 1
      // Predicated region
      $region13: #{blur_embedding_fwd.1} parent=11 // pred_check
        %p140 = pneg %p57
      $region14: #{blur_embedding_fwd.1} parent=11 // pred_check_branch
        %142 = sbr.rel (%p140) target = $region16
      $region15: #{blur_embedding_fwd.1} parent=11 // pred_region
        _
      $region16: #{blur_embedding_fwd.1} parent=11 // pred_fallthru
        _
      // Predicated region
      $region17: #{blur_embedding_fwd.1} parent=11 // pred_check
        %p143 = pneg %p78
      $region18: #{blur_embedding_fwd.1} parent=11 // pred_check_branch
        %145 = sbr.rel (%p143) target = $region20
      $region19: #{blur_embedding_fwd.1} parent=11 // pred_region
        _
      $region20: #{blur_embedding_fwd.1} parent=11 // pred_fallthru
        _
      // Predicated region
      $region21: #{blur_embedding_fwd.1} parent=11 // pred_check
        %p146 = pneg %p99
      $region22: #{blur_embedding_fwd.1} parent=11 // pred_check_branch
        %148 = sbr.rel (%p146) target = $region24
      $region23: #{blur_embedding_fwd.1} parent=11 // pred_region
        _
      $region24: #{blur_embedding_fwd.1} parent=11 // pred_fallthru
        _
    $region12: #{blur_embedding_fwd.1} parent=5 // pred_fallthru
      _
    %p149 = scmp.lt.s32.totalorder %s10, 2
    // Predicated region
    $region25: #{blur_embedding_fwd.1} parent=5 // pred_check
      %p150 = pneg %p149
    $region26: #{blur_embedding_fwd.1} parent=5 // pred_check_branch
      %152 = sbr.rel (%p150) target = $region28
    $region27: #{blur_embedding_fwd.1} parent=5 // pred_region
      // Predicated region
      $region29: #{blur_embedding_fwd.1} parent=27 // pred_check
        %p153 = pneg %p30
      $region30: #{blur_embedding_fwd.1} parent=27 // pred_check_branch
        %155 = sbr.rel (%p153) target = $region32
      $region31: #{blur_embedding_fwd.1} parent=27 // pred_region
        %s156 = smul.u32 32, %s10
        %p157 = scmp.lt.s32.totalorder %s156, 63
        %s158 = scalar_select %p157, %s156, 63
        %s159 = smul.addr %s158, 8
        %s160 = scalar_lea.vmem %s0, %s159
        %s161 = smul.u32 32, %s10
      $region32: #{blur_embedding_fwd.1} parent=27 // pred_fallthru
        _
    $region28: #{blur_embedding_fwd.1} parent=5 // pred_fallthru
      _
    %p162 = scmp.le.s32.totalorder 1, %s10
    %p163 = scmp.lt.s32.totalorder %s10, 3
    %p164 = pnand %p162, %p163
    %p165 = pneg %p164
    // Predicated region
    $region33: #{blur_embedding_fwd.1} parent=5 // pred_check
      _
    $region34: #{blur_embedding_fwd.1} parent=5 // pred_check_branch
      %167 = sbr.rel (%p164) target = $region36
    $region35: #{blur_embedding_fwd.1} parent=5 // pred_region
      %s168 = ssub.s32 %s10, 1
      %s169 = smul.u32 32, %s15
      %p170 = scmp.lt.s32.totalorder %s169, 63
      %s171 = scalar_select %p170, %s169, 63
      %s172 = smul.addr %s171, 8
      %s173 = scalar_lea.vmem %s0, %s172
      %p174 = pneg %p36
      %p175 = pneg %p33
      %p176 = pneg %p57
      %p177 = pneg %p54
      %p178 = pneg %p78
      %p179 = pneg %p75
      %p180 = pneg %p99
      %p181 = pneg %p96
      %p182 = pneg %p125
      %p183 = pneg %p122
      %s184 = smul.u32 32, %s15
      %p185 = scmp.lt.s32.totalorder %s184, 63
      %s186 = scalar_select %p185, %s184, 63
      %s187 = smul.addr %s186, 8
      %s188 = scalar_lea.vmem %s4, %s187
      %s189 = smul.u32 32, %s15
      %p190 = scmp.lt.s32.totalorder %s189, 63
      %s191 = scalar_select %p190, %s189, 63
      %s192 = smul.addr %s191, 8
      %s193 = scalar_lea.vmem %s0, %s192
      %s194 = smul.u32 32, %s15
      %s195 = smul.u32 32, %s15
      %p196 = scmp.lt.s32.totalorder %s195, 63
      %s197 = scalar_select %p196, %s195, 63
      %s198 = smul.addr %s197, 8
      %s199 = scalar_lea.vmem %s4, %s198
      %s200 = smul.u32 32, %s15
      %v202 = vld [vmem:[%s193] sm:$0xff]
      %v203 = vld [vmem:[%s193 + $0x8] sm:$0xff]
      %v204 = vld [vmem:[%s193 + $0x10] sm:$0xff]
      %v205 = vld [vmem:[%s193 + $0x18] sm:$0xff]
      %v206 = vld [vmem:[%s193 + $0x20] sm:$0xff]
      %v207 = vld [vmem:[%s193 + $0x28] sm:$0xff]
      %v208 = vld [vmem:[%s193 + $0x30] sm:$0xff]
      %v209 = vld [vmem:[%s193 + $0x38] sm:$0xff]
      %v210 = vld [vmem:[%s193 + $0x40] sm:$0xff]
      %v211 = vld [vmem:[%s193 + $0x48] sm:$0xff]
      %v212 = vld [vmem:[%s193 + $0x50] sm:$0xff]
      %v213 = vld [vmem:[%s193 + $0x58] sm:$0xff]
      %v214 = vld [vmem:[%s193 + $0x60] sm:$0xff]
      %v215 = vld [vmem:[%s193 + $0x68] sm:$0xff]
      %v216 = vld [vmem:[%s193 + $0x70] sm:$0xff]
      %v217 = vld [vmem:[%s193 + $0x78] sm:$0xff]
      %v218 = vld [vmem:[%s193 + $0x80] sm:$0xff]
      %v219 = vld [vmem:[%s193 + $0x88] sm:$0xff]
      %v220 = vld [vmem:[%s193 + $0x90] sm:$0xff]
      %v221 = vld [vmem:[%s193 + $0x98] sm:$0xff]
      %v222 = vld [vmem:[%s193 + $0xa0] sm:$0xff]
      %v223 = vld [vmem:[%s193 + $0xa8] sm:$0xff]
      %v224 = vld [vmem:[%s193 + $0xb0] sm:$0xff]
      %v225 = vld [vmem:[%s193 + $0xb8] sm:$0xff]
      %v226 = vld [vmem:[%s193 + $0xc0] sm:$0xff]
      %v227 = vld [vmem:[%s193 + $0xc8] sm:$0xff]
      %v228 = vld [vmem:[%s193 + $0xd0] sm:$0xff]
      %v229 = vld [vmem:[%s193 + $0xd8] sm:$0xff]
      %v230 = vld [vmem:[%s193 + $0xe0] sm:$0xff]
      %v231 = vld [vmem:[%s193 + $0xe8] sm:$0xff]
      %v232 = vld [vmem:[%s193 + $0xf0] sm:$0xff]
      %v233 = vld [vmem:[%s193 + $0xf8] sm:$0xff]
      %v234 = vld [vmem:[%s1] sm:$0x1]
      %236 = vset.pattern.permute.xlu0 0
      %237 = vperm.xlu0 %236, %v202
      %v238 = vpop.permute.xlu0 %237
      %241 = vset.pattern.permute.xlu0 0
      %242 = vperm.xlu0 %241, %v203
      %v243 = vpop.permute.xlu0 %242
      %246 = vset.pattern.permute.xlu0 0
      %247 = vperm.xlu0 %246, %v204
      %v248 = vpop.permute.xlu0 %247
      %251 = vset.pattern.permute.xlu0 0
      %252 = vperm.xlu0 %251, %v205
      %v253 = vpop.permute.xlu0 %252
      %256 = vset.pattern.permute.xlu0 0
      %257 = vperm.xlu0 %256, %v206
      %v258 = vpop.permute.xlu0 %257
      %261 = vset.pattern.permute.xlu0 0
      %262 = vperm.xlu0 %261, %v207
      %v263 = vpop.permute.xlu0 %262
      %266 = vset.pattern.permute.xlu0 0
      %267 = vperm.xlu0 %266, %v208
      %v268 = vpop.permute.xlu0 %267
      %271 = vset.pattern.permute.xlu0 0
      %272 = vperm.xlu0 %271, %v209
      %v273 = vpop.permute.xlu0 %272
      %276 = vset.pattern.permute.xlu0 0
      %277 = vperm.xlu0 %276, %v210
      %v278 = vpop.permute.xlu0 %277
      %281 = vset.pattern.permute.xlu0 0
      %282 = vperm.xlu0 %281, %v211
      %v283 = vpop.permute.xlu0 %282
      %286 = vset.pattern.permute.xlu0 0
      %287 = vperm.xlu0 %286, %v212
      %v288 = vpop.permute.xlu0 %287
      %291 = vset.pattern.permute.xlu0 0
      %292 = vperm.xlu0 %291, %v213
      %v293 = vpop.permute.xlu0 %292
      %296 = vset.pattern.permute.xlu0 0
      %297 = vperm.xlu0 %296, %v214
      %v298 = vpop.permute.xlu0 %297
      %301 = vset.pattern.permute.xlu0 0
      %302 = vperm.xlu0 %301, %v215
      %v303 = vpop.permute.xlu0 %302
      %306 = vset.pattern.permute.xlu0 0
      %307 = vperm.xlu0 %306, %v216
      %v308 = vpop.permute.xlu0 %307
      %311 = vset.pattern.permute.xlu0 0
      %312 = vperm.xlu0 %311, %v217
      %v313 = vpop.permute.xlu0 %312
      %316 = vset.pattern.permute.xlu0 0
      %317 = vperm.xlu0 %316, %v218
      %v318 = vpop.permute.xlu0 %317
      %321 = vset.pattern.permute.xlu0 0
      %322 = vperm.xlu0 %321, %v219
      %v323 = vpop.permute.xlu0 %322
      %326 = vset.pattern.permute.xlu0 0
      %327 = vperm.xlu0 %326, %v220
      %v328 = vpop.permute.xlu0 %327
      %331 = vset.pattern.permute.xlu0 0
      %332 = vperm.xlu0 %331, %v221
      %v333 = vpop.permute.xlu0 %332
      %336 = vset.pattern.permute.xlu0 0
      %337 = vperm.xlu0 %336, %v222
      %v338 = vpop.permute.xlu0 %337
      %341 = vset.pattern.permute.xlu0 0
      %342 = vperm.xlu0 %341, %v223
      %v343 = vpop.permute.xlu0 %342
      %346 = vset.pattern.permute.xlu0 0
      %347 = vperm.xlu0 %346, %v224
      %v348 = vpop.permute.xlu0 %347
      %351 = vset.pattern.permute.xlu0 0
      %352 = vperm.xlu0 %351, %v225
      %v353 = vpop.permute.xlu0 %352
      %356 = vset.pattern.permute.xlu0 0
      %357 = vperm.xlu0 %356, %v226
      %v358 = vpop.permute.xlu0 %357
      %361 = vset.pattern.permute.xlu0 0
      %362 = vperm.xlu0 %361, %v227
      %v363 = vpop.permute.xlu0 %362
      %366 = vset.pattern.permute.xlu0 0
      %367 = vperm.xlu0 %366, %v228
      %v368 = vpop.permute.xlu0 %367
      %371 = vset.pattern.permute.xlu0 0
      %372 = vperm.xlu0 %371, %v229
      %v373 = vpop.permute.xlu0 %372
      %376 = vset.pattern.permute.xlu0 0
      %377 = vperm.xlu0 %376, %v230
      %v378 = vpop.permute.xlu0 %377
      %381 = vset.pattern.permute.xlu0 0
      %382 = vperm.xlu0 %381, %v231
      %v383 = vpop.permute.xlu0 %382
      %386 = vset.pattern.permute.xlu0 0
      %387 = vperm.xlu0 %386, %v232
      %v388 = vpop.permute.xlu0 %387
      %391 = vset.pattern.permute.xlu0 0
      %392 = vperm.xlu0 %391, %v233
      %v393 = vpop.permute.xlu0 %392
      %v396 = vlaneseq
      %v397 = vshrl.u32 %v396, 7
      %v398 = vsub.s32 0, %v397
      %v399 = vrot.slane %v234, %v398
      %v401 = vmul.f32 %v238, %v399
      %v402 = vmul.f32 %v243, %v399
      %v403 = vmul.f32 %v248, %v399
      %v404 = vmul.f32 %v253, %v399
      %v405 = vmul.f32 %v258, %v399
      %v406 = vmul.f32 %v263, %v399
      %v407 = vmul.f32 %v268, %v399
      %v408 = vmul.f32 %v273, %v399
      %v409 = vmul.f32 %v278, %v399
      %v410 = vmul.f32 %v283, %v399
      %v411 = vmul.f32 %v288, %v399
      %v412 = vmul.f32 %v293, %v399
      %v413 = vmul.f32 %v298, %v399
      %v414 = vmul.f32 %v303, %v399
      %v415 = vmul.f32 %v308, %v399
      %v416 = vmul.f32 %v313, %v399
      %v417 = vmul.f32 %v318, %v399
      %v418 = vmul.f32 %v323, %v399
      %v419 = vmul.f32 %v328, %v399
      %v420 = vmul.f32 %v333, %v399
      %v421 = vmul.f32 %v338, %v399
      %v422 = vmul.f32 %v343, %v399
      %v423 = vmul.f32 %v348, %v399
      %v424 = vmul.f32 %v353, %v399
      %v425 = vmul.f32 %v358, %v399
      %v426 = vmul.f32 %v363, %v399
      %v427 = vmul.f32 %v368, %v399
      %v428 = vmul.f32 %v373, %v399
      %v429 = vmul.f32 %v378, %v399
      %v430 = vmul.f32 %v383, %v399
      %v431 = vmul.f32 %v388, %v399
      %v432 = vmul.f32 %v393, %v399
      %v433 = vld [vmem:[%s3] sm:$0x1]
      %v435 = vlaneseq
      %v436 = vshrl.u32 %v435, 7
      %v437 = vsub.s32 0, %v436
      %v438 = vrot.slane %v433, %v437
      %v440 = vadd.f32 %v401, %v438
      %v441 = vadd.f32 %v402, %v438
      %v442 = vadd.f32 %v403, %v438
      %v443 = vadd.f32 %v404, %v438
      %v444 = vadd.f32 %v405, %v438
      %v445 = vadd.f32 %v406, %v438
      %v446 = vadd.f32 %v407, %v438
      %v447 = vadd.f32 %v408, %v438
      %v448 = vadd.f32 %v409, %v438
      %v449 = vadd.f32 %v410, %v438
      %v450 = vadd.f32 %v411, %v438
      %v451 = vadd.f32 %v412, %v438
      %v452 = vadd.f32 %v413, %v438
      %v453 = vadd.f32 %v414, %v438
      %v454 = vadd.f32 %v415, %v438
      %v455 = vadd.f32 %v416, %v438
      %v456 = vadd.f32 %v417, %v438
      %v457 = vadd.f32 %v418, %v438
      %v458 = vadd.f32 %v419, %v438
      %v459 = vadd.f32 %v420, %v438
      %v460 = vadd.f32 %v421, %v438
      %v461 = vadd.f32 %v422, %v438
      %v462 = vadd.f32 %v423, %v438
      %v463 = vadd.f32 %v424, %v438
      %v464 = vadd.f32 %v425, %v438
      %v465 = vadd.f32 %v426, %v438
      %v466 = vadd.f32 %v427, %v438
      %v467 = vadd.f32 %v428, %v438
      %v468 = vadd.f32 %v429, %v438
      %v469 = vadd.f32 %v430, %v438
      %v470 = vadd.f32 %v431, %v438
      %v471 = vadd.f32 %v432, %v438
      %v472 = vmul.f32 %v440, 0.2
      %v473 = vmul.f32 %v441, 0.2
      %v474 = vmul.f32 %v442, 0.2
      %v475 = vmul.f32 %v443, 0.2
      %v476 = vmul.f32 %v444, 0.2
      %v477 = vmul.f32 %v445, 0.2
      %v478 = vmul.f32 %v446, 0.2
      %v479 = vmul.f32 %v447, 0.2
      %v480 = vmul.f32 %v448, 0.2
      %v481 = vmul.f32 %v449, 0.2
      %v482 = vmul.f32 %v450, 0.2
      %v483 = vmul.f32 %v451, 0.2
      %v484 = vmul.f32 %v452, 0.2
      %v485 = vmul.f32 %v453, 0.2
      %v486 = vmul.f32 %v454, 0.2
      %v487 = vmul.f32 %v455, 0.2
      %v488 = vmul.f32 %v456, 0.2
      %v489 = vmul.f32 %v457, 0.2
      %v490 = vmul.f32 %v458, 0.2
      %v491 = vmul.f32 %v459, 0.2
      %v492 = vmul.f32 %v460, 0.2
      %v493 = vmul.f32 %v461, 0.2
      %v494 = vmul.f32 %v462, 0.2
      %v495 = vmul.f32 %v463, 0.2
      %v496 = vmul.f32 %v464, 0.2
      %v497 = vmul.f32 %v465, 0.2
      %v498 = vmul.f32 %v466, 0.2
      %v499 = vmul.f32 %v467, 0.2
      %v500 = vmul.f32 %v468, 0.2
      %v501 = vmul.f32 %v469, 0.2
      %v502 = vmul.f32 %v470, 0.2
      %v503 = vmul.f32 %v471, 0.2
      %v504 = vmax.f32 %v440, %v472
      %v505 = vmax.f32 %v441, %v473
      %v506 = vmax.f32 %v442, %v474
      %v507 = vmax.f32 %v443, %v475
      %v508 = vmax.f32 %v444, %v476
      %v509 = vmax.f32 %v445, %v477
      %v510 = vmax.f32 %v446, %v478
      %v511 = vmax.f32 %v447, %v479
      %v512 = vmax.f32 %v448, %v480
      %v513 = vmax.f32 %v449, %v481
      %v514 = vmax.f32 %v450, %v482
      %v515 = vmax.f32 %v451, %v483
      %v516 = vmax.f32 %v452, %v484
      %v517 = vmax.f32 %v453, %v485
      %v518 = vmax.f32 %v454, %v486
      %v519 = vmax.f32 %v455, %v487
      %v520 = vmax.f32 %v456, %v488
      %v521 = vmax.f32 %v457, %v489
      %v522 = vmax.f32 %v458, %v490
      %v523 = vmax.f32 %v459, %v491
      %v524 = vmax.f32 %v460, %v492
      %v525 = vmax.f32 %v461, %v493
      %v526 = vmax.f32 %v462, %v494
      %v527 = vmax.f32 %v463, %v495
      %v528 = vmax.f32 %v464, %v496
      %v529 = vmax.f32 %v465, %v497
      %v530 = vmax.f32 %v466, %v498
      %v531 = vmax.f32 %v467, %v499
      %v532 = vmax.f32 %v468, %v500
      %v533 = vmax.f32 %v469, %v501
      %v534 = vmax.f32 %v470, %v502
      %v535 = vmax.f32 %v471, %v503
      %v536 = vpack.c.bf16 %v505, %v504
      %v537 = vpack.c.bf16 %v507, %v506
      %v538 = vpack.c.bf16 %v509, %v508
      %v539 = vpack.c.bf16 %v511, %v510
      %v540 = vpack.c.bf16 %v513, %v512
      %v541 = vpack.c.bf16 %v515, %v514
      %v542 = vpack.c.bf16 %v517, %v516
      %v543 = vpack.c.bf16 %v519, %v518
      %v544 = vpack.c.bf16 %v521, %v520
      %v545 = vpack.c.bf16 %v523, %v522
      %v546 = vpack.c.bf16 %v525, %v524
      %v547 = vpack.c.bf16 %v527, %v526
      %v548 = vpack.c.bf16 %v529, %v528
      %v549 = vpack.c.bf16 %v531, %v530
      %v550 = vpack.c.bf16 %v533, %v532
      %v551 = vpack.c.bf16 %v535, %v534
      %v552 = vld [vmem:[%s2] sm:$0xf]
      %v553 = vld [vmem:[%s2 + $0x4] sm:$0xf]
      %v554 = vld [vmem:[%s2 + $0x8] sm:$0xf]
      %v555 = vld [vmem:[%s2 + $0xc] sm:$0xf]
      %v556 = vld [vmem:[%s2 + $0x10] sm:$0xf]
      %v557 = vld [vmem:[%s2 + $0x14] sm:$0xf]
      %v558 = vld [vmem:[%s2 + $0x18] sm:$0xf]
      %v559 = vld [vmem:[%s2 + $0x1c] sm:$0xf]
      %v560 = vld [vmem:[%s2 + $0x20] sm:$0xf]
      %v561 = vld [vmem:[%s2 + $0x24] sm:$0xf]
      %v562 = vld [vmem:[%s2 + $0x28] sm:$0xf]
      %v563 = vld [vmem:[%s2 + $0x2c] sm:$0xf]
      %v564 = vld [vmem:[%s2 + $0x30] sm:$0xf]
      %v565 = vld [vmem:[%s2 + $0x34] sm:$0xf]
      %v566 = vld [vmem:[%s2 + $0x38] sm:$0xf]
      %v567 = vld [vmem:[%s2 + $0x3c] sm:$0xf]
      %s568 = scalar_lea.vmem %s3, 1
      %v569 = vld [vmem:[%s568] sm:$0x1]
      %v571 = vlaneseq
      %v572 = vshrl.u32 %v571, 7
      %v573 = vsub.s32 0, %v572
      %v574 = vrot.slane %v569, %v573
      %v592 = vunpack.c.l.b16 %v552
      %v593 = vunpack.c.l.b16 %v553
      %v594 = vunpack.c.l.b16 %v554
      %v595 = vunpack.c.l.b16 %v555
      %v596 = vunpack.c.l.b16 %v556
      %v597 = vunpack.c.l.b16 %v557
      %v598 = vunpack.c.l.b16 %v558
      %v599 = vunpack.c.l.b16 %v559
      %v600 = vunpack.c.l.b16 %v560
      %v601 = vunpack.c.l.b16 %v561
      %v602 = vunpack.c.l.b16 %v562
      %v603 = vunpack.c.l.b16 %v563
      %v604 = vunpack.c.l.b16 %v564
      %v605 = vunpack.c.l.b16 %v565
      %v606 = vunpack.c.l.b16 %v566
      %v607 = vunpack.c.l.b16 %v567
      %v608 = vpack.c.b16 %v593, %v592
      %v609 = vpack.c.b16 %v595, %v594
      %v610 = vpack.c.b16 %v597, %v596
      %v611 = vpack.c.b16 %v599, %v598
      %v612 = vpack.c.b16 %v601, %v600
      %v613 = vpack.c.b16 %v603, %v602
      %v614 = vpack.c.b16 %v605, %v604
      %v615 = vpack.c.b16 %v607, %v606
      %624 = vmatprep.subr.bf16.mxu0 0
      %625 = vmatpush1.bf16.msra.mxu0 %v608
      %626 = vmatprep.subr.bf16.mxu0 0
      %627 = vmatpush1.bf16.msra.mxu0 %v609
      %628 = vmatprep.subr.bf16.mxu0 0
      %629 = vmatpush1.bf16.msra.mxu0 %v610
      %630 = vmatprep.subr.bf16.mxu0 0
      %631 = vmatpush1.bf16.msra.mxu0 %v611
      %632 = vmatprep.subr.bf16.mxu0 0
      %633 = vmatpush1.bf16.msra.mxu0 %v612
      %634 = vmatprep.subr.bf16.mxu0 0
      %635 = vmatpush1.bf16.msra.mxu0 %v613
      %636 = vmatprep.subr.bf16.mxu0 0
      %637 = vmatpush1.bf16.msra.mxu0 %v614
      %638 = vmatprep.subr.bf16.mxu0 0
      %639 = vmatpush1.bf16.msra.mxu0 %v615
      %640 = vmatprep.subr.bf16.mxu0 0
      %641 = vmatpush1.bf16.msra.mxu0 0
      %642 = vmatprep.subr.bf16.mxu0 0
      %643 = vmatpush1.bf16.msra.mxu0 0
      %644 = vmatprep.subr.bf16.mxu0 0
      %645 = vmatpush1.bf16.msra.mxu0 0
      %646 = vmatprep.subr.bf16.mxu0 0
      %647 = vmatpush1.bf16.msra.mxu0 0
      %648 = vmatprep.subr.bf16.mxu0 0
      %649 = vmatpush1.bf16.msra.mxu0 0
      %650 = vmatprep.subr.bf16.mxu0 0
      %651 = vmatpush1.bf16.msra.mxu0 0
      %652 = vmatprep.subr.bf16.mxu0 0
      %653 = vmatpush1.bf16.msra.mxu0 0
      %654 = vmatprep.subr.bf16.mxu0 0
      %655 = vmatpush1.bf16.msra.mxu0 0
      %656 = vmatprep.mubr.bf16.mxu0 0
      %657 = vmatmul.mubr.bf16.gmra.mrb[0].mxu0 %v536
      %v658 = vpop.f32.mrb[0].mxu0
      %v659 = vadd.f32 %v574, %v658
      %v660 = vpop.f32.mrb[0].mxu0
      %v661 = vpop.f32.mrb[0].mxu0
      %v662 = vadd.f32 %v574, %v661
      %v663 = vpop.f32.mrb[0].mxu0
      %664 = vmatprep.mubr.bf16.mxu0 0
      %665 = vmatmul.mubr.bf16.gmra.mrb[0].mxu0 %v537
      %v666 = vpop.f32.mrb[0].mxu0
      %v667 = vadd.f32 %v574, %v666
      %v668 = vpop.f32.mrb[0].mxu0
      %v669 = vpop.f32.mrb[0].mxu0
      %v670 = vadd.f32 %v574, %v669
      %v671 = vpop.f32.mrb[0].mxu0
      %672 = vmatprep.mubr.bf16.mxu0 0
      %673 = vmatmul.mubr.bf16.gmra.mrb[0].mxu0 %v538
      %v674 = vpop.f32.mrb[0].mxu0
      %v675 = vadd.f32 %v574, %v674
      %v676 = vpop.f32.mrb[0].mxu0
      %v677 = vpop.f32.mrb[0].mxu0
      %v678 = vadd.f32 %v574, %v677
      %v679 = vpop.f32.mrb[0].mxu0
      %680 = vmatprep.mubr.bf16.mxu0 0
      %681 = vmatmul.mubr.bf16.gmra.mrb[0].mxu0 %v539
      %v682 = vpop.f32.mrb[0].mxu0
      %v683 = vadd.f32 %v574, %v682
      %v684 = vpop.f32.mrb[0].mxu0
      %v685 = vpop.f32.mrb[0].mxu0
      %v686 = vadd.f32 %v574, %v685
      %v687 = vpop.f32.mrb[0].mxu0
      %688 = vmatprep.mubr.bf16.mxu0 0
      %689 = vmatmul.mubr.bf16.gmra.mrb[0].mxu0 %v540
      %v690 = vpop.f32.mrb[0].mxu0
      %v691 = vadd.f32 %v574, %v690
      %v692 = vpop.f32.mrb[0].mxu0
      %v693 = vpop.f32.mrb[0].mxu0
      %v694 = vadd.f32 %v574, %v693
      %v695 = vpop.f32.mrb[0].mxu0
      %696 = vmatprep.mubr.bf16.mxu0 0
      %697 = vmatmul.mubr.bf16.gmra.mrb[0].mxu0 %v541
      %v698 = vpop.f32.mrb[0].mxu0
      %v699 = vadd.f32 %v574, %v698
      %v700 = vpop.f32.mrb[0].mxu0
      %v701 = vpop.f32.mrb[0].mxu0
      %v702 = vadd.f32 %v574, %v701
      %v703 = vpop.f32.mrb[0].mxu0
      %704 = vmatprep.mubr.bf16.mxu0 0
      %705 = vmatmul.mubr.bf16.gmra.mrb[0].mxu0 %v542
      %v706 = vpop.f32.mrb[0].mxu0
      %v707 = vadd.f32 %v574, %v706
      %v708 = vpop.f32.mrb[0].mxu0
      %v709 = vpop.f32.mrb[0].mxu0
      %v710 = vadd.f32 %v574, %v709
      %v711 = vpop.f32.mrb[0].mxu0
      %712 = vmatprep.mubr.bf16.mxu0 0
      %713 = vmatmul.mubr.bf16.gmra.mrb[0].mxu0 %v543
      %v714 = vpop.f32.mrb[0].mxu0
      %v715 = vadd.f32 %v574, %v714
      %v716 = vpop.f32.mrb[0].mxu0
      %v717 = vpop.f32.mrb[0].mxu0
      %v718 = vadd.f32 %v574, %v717
      %v719 = vpop.f32.mrb[0].mxu0
      %720 = vmatprep.mubr.bf16.mxu0 0
      %721 = vmatmul.mubr.bf16.gmra.mrb[0].mxu0 %v544
      %v722 = vpop.f32.mrb[0].mxu0
      %v723 = vadd.f32 %v574, %v722
      %v724 = vpop.f32.mrb[0].mxu0
      %v725 = vpop.f32.mrb[0].mxu0
      %v726 = vadd.f32 %v574, %v725
      %v727 = vpop.f32.mrb[0].mxu0
      %728 = vmatprep.mubr.bf16.mxu0 0
      %729 = vmatmul.mubr.bf16.gmra.mrb[0].mxu0 %v545
      %v730 = vpop.f32.mrb[0].mxu0
      %v731 = vadd.f32 %v574, %v730
      %v732 = vpop.f32.mrb[0].mxu0
      %v733 = vpop.f32.mrb[0].mxu0
      %v734 = vadd.f32 %v574, %v733
      %v735 = vpop.f32.mrb[0].mxu0
      %736 = vmatprep.mubr.bf16.mxu0 0
      %737 = vmatmul.mubr.bf16.gmra.mrb[0].mxu0 %v546
      %v738 = vpop.f32.mrb[0].mxu0
      %v739 = vadd.f32 %v574, %v738
      %v740 = vpop.f32.mrb[0].mxu0
      %v741 = vpop.f32.mrb[0].mxu0
      %v742 = vadd.f32 %v574, %v741
      %v743 = vpop.f32.mrb[0].mxu0
      %744 = vmatprep.mubr.bf16.mxu0 0
      %745 = vmatmul.mubr.bf16.gmra.mrb[0].mxu0 %v547
      %v746 = vpop.f32.mrb[0].mxu0
      %v747 = vadd.f32 %v574, %v746
      %v748 = vpop.f32.mrb[0].mxu0
      %v749 = vpop.f32.mrb[0].mxu0
      %v750 = vadd.f32 %v574, %v749
      %v751 = vpop.f32.mrb[0].mxu0
      %752 = vmatprep.mubr.bf16.mxu0 0
      %753 = vmatmul.mubr.bf16.gmra.mrb[0].mxu0 %v548
      %v754 = vpop.f32.mrb[0].mxu0
      %v755 = vadd.f32 %v574, %v754
      %v756 = vpop.f32.mrb[0].mxu0
      %v757 = vpop.f32.mrb[0].mxu0
      %v758 = vadd.f32 %v574, %v757
      %v759 = vpop.f32.mrb[0].mxu0
      %760 = vmatprep.mubr.bf16.mxu0 0
      %761 = vmatmul.mubr.bf16.gmra.mrb[0].mxu0 %v549
      %v762 = vpop.f32.mrb[0].mxu0
      %v763 = vadd.f32 %v574, %v762
      %v764 = vpop.f32.mrb[0].mxu0
      %v765 = vpop.f32.mrb[0].mxu0
      %v766 = vadd.f32 %v574, %v765
      %v767 = vpop.f32.mrb[0].mxu0
      %768 = vmatprep.mubr.bf16.mxu0 0
      %769 = vmatmul.mubr.bf16.gmra.mrb[0].mxu0 %v550
      %v770 = vpop.f32.mrb[0].mxu0
      %v771 = vadd.f32 %v574, %v770
      %v772 = vpop.f32.mrb[0].mxu0
      %v773 = vpop.f32.mrb[0].mxu0
      %v774 = vadd.f32 %v574, %v773
      %v775 = vpop.f32.mrb[0].mxu0
      %776 = vmatprep.mubr.bf16.mxu0 0
      %777 = vmatmul.mubr.bf16.gmra.mrb[0].mxu0 %v551
      %v778 = vpop.f32.mrb[0].mxu0
      %v779 = vadd.f32 %v574, %v778
      %v780 = vpop.f32.mrb[0].mxu0
      %v781 = vpop.f32.mrb[0].mxu0
      %v782 = vadd.f32 %v574, %v781
      %v783 = vpop.f32.mrb[0].mxu0
      %784 = vdwg.mxu0
      %v785 = vmul.f32 %v659, 0.2
      %v786 = vmul.f32 %v662, 0.2
      %v787 = vmul.f32 %v667, 0.2
      %v788 = vmul.f32 %v670, 0.2
      %v789 = vmul.f32 %v675, 0.2
      %v790 = vmul.f32 %v678, 0.2
      %v791 = vmul.f32 %v683, 0.2
      %v792 = vmul.f32 %v686, 0.2
      %v793 = vmul.f32 %v691, 0.2
      %v794 = vmul.f32 %v694, 0.2
      %v795 = vmul.f32 %v699, 0.2
      %v796 = vmul.f32 %v702, 0.2
      %v797 = vmul.f32 %v707, 0.2
      %v798 = vmul.f32 %v710, 0.2
      %v799 = vmul.f32 %v715, 0.2
      %v800 = vmul.f32 %v718, 0.2
      %v801 = vmul.f32 %v723, 0.2
      %v802 = vmul.f32 %v726, 0.2
      %v803 = vmul.f32 %v731, 0.2
      %v804 = vmul.f32 %v734, 0.2
      %v805 = vmul.f32 %v739, 0.2
      %v806 = vmul.f32 %v742, 0.2
      %v807 = vmul.f32 %v747, 0.2
      %v808 = vmul.f32 %v750, 0.2
      %v809 = vmul.f32 %v755, 0.2
      %v810 = vmul.f32 %v758, 0.2
      %v811 = vmul.f32 %v763, 0.2
      %v812 = vmul.f32 %v766, 0.2
      %v813 = vmul.f32 %v771, 0.2
      %v814 = vmul.f32 %v774, 0.2
      %v815 = vmul.f32 %v779, 0.2
      %v816 = vmul.f32 %v782, 0.2
      %v817 = vmax.f32 %v659, %v785
      %v818 = vmax.f32 %v662, %v786
      %v819 = vmax.f32 %v667, %v787
      %v820 = vmax.f32 %v670, %v788
      %v821 = vmax.f32 %v675, %v789
      %v822 = vmax.f32 %v678, %v790
      %v823 = vmax.f32 %v683, %v791
      %v824 = vmax.f32 %v686, %v792
      %v825 = vmax.f32 %v691, %v793
      %v826 = vmax.f32 %v694, %v794
      %v827 = vmax.f32 %v699, %v795
      %v828 = vmax.f32 %v702, %v796
      %v829 = vmax.f32 %v707, %v797
      %v830 = vmax.f32 %v710, %v798
      %v831 = vmax.f32 %v715, %v799
      %v832 = vmax.f32 %v718, %v800
      %v833 = vmax.f32 %v723, %v801
      %v834 = vmax.f32 %v726, %v802
      %v835 = vmax.f32 %v731, %v803
      %v836 = vmax.f32 %v734, %v804
      %v837 = vmax.f32 %v739, %v805
      %v838 = vmax.f32 %v742, %v806
      %v839 = vmax.f32 %v747, %v807
      %v840 = vmax.f32 %v750, %v808
      %v841 = vmax.f32 %v755, %v809
      %v842 = vmax.f32 %v758, %v810
      %v843 = vmax.f32 %v763, %v811
      %v844 = vmax.f32 %v766, %v812
      %v845 = vmax.f32 %v771, %v813
      %v846 = vmax.f32 %v774, %v814
      %v847 = vmax.f32 %v779, %v815
      %v848 = vmax.f32 %v782, %v816
      %v849 = vpack.c.bf16 %v818, %v817
      %v850 = vpack.c.bf16 %v820, %v819
      %v851 = vpack.c.bf16 %v822, %v821
      %v852 = vpack.c.bf16 %v824, %v823
      %v853 = vpack.c.bf16 %v826, %v825
      %v854 = vpack.c.bf16 %v828, %v827
      %v855 = vpack.c.bf16 %v830, %v829
      %v856 = vpack.c.bf16 %v832, %v831
      %v857 = vpack.c.bf16 %v834, %v833
      %v858 = vpack.c.bf16 %v836, %v835
      %v859 = vpack.c.bf16 %v838, %v837
      %v860 = vpack.c.bf16 %v840, %v839
      %v861 = vpack.c.bf16 %v842, %v841
      %v862 = vpack.c.bf16 %v844, %v843
      %v863 = vpack.c.bf16 %v846, %v845
      %v864 = vpack.c.bf16 %v848, %v847
      %s865 = scalar_lea.vmem %s2, 64
      %v866 = vld [vmem:[%s865] sm:$0xf]
      %v867 = vld [vmem:[%s865 + $0x4] sm:$0xf]
      %v868 = vld [vmem:[%s865 + $0x8] sm:$0xf]
      %v869 = vld [vmem:[%s865 + $0xc] sm:$0xf]
      %v870 = vld [vmem:[%s865 + $0x10] sm:$0xf]
      %v871 = vld [vmem:[%s865 + $0x14] sm:$0xf]
      %v872 = vld [vmem:[%s865 + $0x18] sm:$0xf]
      %v873 = vld [vmem:[%s865 + $0x1c] sm:$0xf]
      %v874 = vld [vmem:[%s865 + $0x20] sm:$0xf]
      %v875 = vld [vmem:[%s865 + $0x24] sm:$0xf]
      %v876 = vld [vmem:[%s865 + $0x28] sm:$0xf]
      %v877 = vld [vmem:[%s865 + $0x2c] sm:$0xf]
      %v878 = vld [vmem:[%s865 + $0x30] sm:$0xf]
      %v879 = vld [vmem:[%s865 + $0x34] sm:$0xf]
      %v880 = vld [vmem:[%s865 + $0x38] sm:$0xf]
      %v881 = vld [vmem:[%s865 + $0x3c] sm:$0xf]
      %s882 = scalar_lea.vmem %s3, 2
      %v883 = vld [vmem:[%s882] sm:$0x1]
      %v885 = vlaneseq
      %v886 = vshrl.u32 %v885, 7
      %v887 = vsub.s32 0, %v886
      %v888 = vrot.slane %v883, %v887
      %v906 = vunpack.c.l.b16 %v866
      %v907 = vunpack.c.l.b16 %v867
      %v908 = vunpack.c.l.b16 %v868
      %v909 = vunpack.c.l.b16 %v869
      %v910 = vunpack.c.l.b16 %v870
      %v911 = vunpack.c.l.b16 %v871
      %v912 = vunpack.c.l.b16 %v872
      %v913 = vunpack.c.l.b16 %v873
      %v914 = vunpack.c.l.b16 %v874
      %v915 = vunpack.c.l.b16 %v875
      %v916 = vunpack.c.l.b16 %v876
      %v917 = vunpack.c.l.b16 %v877
      %v918 = vunpack.c.l.b16 %v878
      %v919 = vunpack.c.l.b16 %v879
      %v920 = vunpack.c.l.b16 %v880
      %v921 = vunpack.c.l.b16 %v881
      %v922 = vpack.c.b16 %v907, %v906
      %v923 = vpack.c.b16 %v909, %v908
      %v924 = vpack.c.b16 %v911, %v910
      %v925 = vpack.c.b16 %v913, %v912
      %v926 = vpack.c.b16 %v915, %v914
      %v927 = vpack.c.b16 %v917, %v916
      %v928 = vpack.c.b16 %v919, %v918
      %v929 = vpack.c.b16 %v921, %v920
      %938 = vmatprep.subr.bf16.mxu0 0
      %939 = vmatpush1.bf16.msra.mxu0 %v922
      %940 = vmatprep.subr.bf16.mxu0 0
      %941 = vmatpush1.bf16.msra.mxu0 %v923
      %942 = vmatprep.subr.bf16.mxu0 0
      %943 = vmatpush1.bf16.msra.mxu0 %v924
      %944 = vmatprep.subr.bf16.mxu0 0
      %945 = vmatpush1.bf16.msra.mxu0 %v925
      %946 = vmatprep.subr.bf16.mxu0 0
      %947 = vmatpush1.bf16.msra.mxu0 %v926
      %948 = vmatprep.subr.bf16.mxu0 0
      %949 = vmatpush1.bf16.msra.mxu0 %v927
      %950 = vmatprep.subr.bf16.mxu0 0
      %951 = vmatpush1.bf16.msra.mxu0 %v928
      %952 = vmatprep.subr.bf16.mxu0 0
      %953 = vmatpush1.bf16.msra.mxu0 %v929
      %954 = vmatprep.subr.bf16.mxu0 0
      %955 = vmatpush1.bf16.msra.mxu0 0
      %956 = vmatprep.subr.bf16.mxu0 0
      %957 = vmatpush1.bf16.msra.mxu0 0
      %958 = vmatprep.subr.bf16.mxu0 0
      %959 = vmatpush1.bf16.msra.mxu0 0
      %960 = vmatprep.subr.bf16.mxu0 0
      %961 = vmatpush1.bf16.msra.mxu0 0
      %962 = vmatprep.subr.bf16.mxu0 0
      %963 = vmatpush1.bf16.msra.mxu0 0
      %964 = vmatprep.subr.bf16.mxu0 0
      %965 = vmatpush1.bf16.msra.mxu0 0
      %966 = vmatprep.subr.bf16.mxu0 0
      %967 = vmatpush1.bf16.msra.mxu0 0
      %968 = vmatprep.subr.bf16.mxu0 0
      %969 = vmatpush1.bf16.msra.mxu0 0
      %970 = vmatprep.mubr.bf16.mxu0 0
      %971 = vmatmul.mubr.bf16.gmra.mrb[0].mxu0 %v849
      %v972 = vpop.f32.mrb[0].mxu0
      %v973 = vadd.f32 %v888, %v972
      %v974 = vpop.f32.mrb[0].mxu0
      %v975 = vpop.f32.mrb[0].mxu0
      %v976 = vadd.f32 %v888, %v975
      %v977 = vpop.f32.mrb[0].mxu0
      %978 = vmatprep.mubr.bf16.mxu0 0
      %979 = vmatmul.mubr.bf16.gmra.mrb[0].mxu0 %v850
      %v980 = vpop.f32.mrb[0].mxu0
      %v981 = vadd.f32 %v888, %v980
      %v982 = vpop.f32.mrb[0].mxu0
      %v983 = vpop.f32.mrb[0].mxu0
      %v984 = vadd.f32 %v888, %v983
      %v985 = vpop.f32.mrb[0].mxu0
      %986 = vmatprep.mubr.bf16.mxu0 0
      %987 = vmatmul.mubr.bf16.gmra.mrb[0].mxu0 %v851
      %v988 = vpop.f32.mrb[0].mxu0
      %v989 = vadd.f32 %v888, %v988
      %v990 = vpop.f32.mrb[0].mxu0
      %v991 = vpop.f32.mrb[0].mxu0
      %v992 = vadd.f32 %v888, %v991
      %v993 = vpop.f32.mrb[0].mxu0
      %994 = vmatprep.mubr.bf16.mxu0 0
      %995 = vmatmul.mubr.bf16.gmra.mrb[0].mxu0 %v852
      %v996 = vpop.f32.mrb[0].mxu0
      %v997 = vadd.f32 %v888, %v996
      %v998 = vpop.f32.mrb[0].mxu0
      %v999 = vpop.f32.mrb[0].mxu0
      %v1000 = vadd.f32 %v888, %v999
      %v1001 = vpop.f32.mrb[0].mxu0
      %1002 = vmatprep.mubr.bf16.mxu0 0
      %1003 = vmatmul.mubr.bf16.gmra.mrb[0].mxu0 %v853
      %v1004 = vpop.f32.mrb[0].mxu0
      %v1005 = vadd.f32 %v888, %v1004
      %v1006 = vpop.f32.mrb[0].mxu0
      %v1007 = vpop.f32.mrb[0].mxu0
      %v1008 = vadd.f32 %v888, %v1007
      %v1009 = vpop.f32.mrb[0].mxu0
      %1010 = vmatprep.mubr.bf16.mxu0 0
      %1011 = vmatmul.mubr.bf16.gmra.mrb[0].mxu0 %v854
      %v1012 = vpop.f32.mrb[0].mxu0
      %v1013 = vadd.f32 %v888, %v1012
      %v1014 = vpop.f32.mrb[0].mxu0
      %v1015 = vpop.f32.mrb[0].mxu0
      %v1016 = vadd.f32 %v888, %v1015
      %v1017 = vpop.f32.mrb[0].mxu0
      %1018 = vmatprep.mubr.bf16.mxu0 0
      %1019 = vmatmul.mubr.bf16.gmra.mrb[0].mxu0 %v855
      %v1020 = vpop.f32.mrb[0].mxu0
      %v1021 = vadd.f32 %v888, %v1020
      %v1022 = vpop.f32.mrb[0].mxu0
      %v1023 = vpop.f32.mrb[0].mxu0
      %v1024 = vadd.f32 %v888, %v1023
      %v1025 = vpop.f32.mrb[0].mxu0
      %1026 = vmatprep.mubr.bf16.mxu0 0
      %1027 = vmatmul.mubr.bf16.gmra.mrb[0].mxu0 %v856
      %v1028 = vpop.f32.mrb[0].mxu0
      %v1029 = vadd.f32 %v888, %v1028
      %v1030 = vpop.f32.mrb[0].mxu0
      %v1031 = vpop.f32.mrb[0].mxu0
      %v1032 = vadd.f32 %v888, %v1031
      %v1033 = vpop.f32.mrb[0].mxu0
      %1034 = vmatprep.mubr.bf16.mxu0 0
      %1035 = vmatmul.mubr.bf16.gmra.mrb[0].mxu0 %v857
      %v1036 = vpop.f32.mrb[0].mxu0
      %v1037 = vadd.f32 %v888, %v1036
      %v1038 = vpop.f32.mrb[0].mxu0
      %v1039 = vpop.f32.mrb[0].mxu0
      %v1040 = vadd.f32 %v888, %v1039
      %v1041 = vpop.f32.mrb[0].mxu0
      %1042 = vmatprep.mubr.bf16.mxu0 0
      %1043 = vmatmul.mubr.bf16.gmra.mrb[0].mxu0 %v858
      %v1044 = vpop.f32.mrb[0].mxu0
      %v1045 = vadd.f32 %v888, %v1044
      %v1046 = vpop.f32.mrb[0].mxu0
      %v1047 = vpop.f32.mrb[0].mxu0
      %v1048 = vadd.f32 %v888, %v1047
      %v1049 = vpop.f32.mrb[0].mxu0
      %1050 = vmatprep.mubr.bf16.mxu0 0
      %1051 = vmatmul.mubr.bf16.gmra.mrb[0].mxu0 %v859
      %v1052 = vpop.f32.mrb[0].mxu0
      %v1053 = vadd.f32 %v888, %v1052
      %v1054 = vpop.f32.mrb[0].mxu0
      %v1055 = vpop.f32.mrb[0].mxu0
      %v1056 = vadd.f32 %v888, %v1055
      %v1057 = vpop.f32.mrb[0].mxu0
      %1058 = vmatprep.mubr.bf16.mxu0 0
      %1059 = vmatmul.mubr.bf16.gmra.mrb[0].mxu0 %v860
      %v1060 = vpop.f32.mrb[0].mxu0
      %v1061 = vadd.f32 %v888, %v1060
      %v1062 = vpop.f32.mrb[0].mxu0
      %v1063 = vpop.f32.mrb[0].mxu0
      %v1064 = vadd.f32 %v888, %v1063
      %v1065 = vpop.f32.mrb[0].mxu0
      %1066 = vmatprep.mubr.bf16.mxu0 0
      %1067 = vmatmul.mubr.bf16.gmra.mrb[0].mxu0 %v861
      %v1068 = vpop.f32.mrb[0].mxu0
      %v1069 = vadd.f32 %v888, %v1068
      %v1070 = vpop.f32.mrb[0].mxu0
      %v1071 = vpop.f32.mrb[0].mxu0
      %v1072 = vadd.f32 %v888, %v1071
      %v1073 = vpop.f32.mrb[0].mxu0
      %1074 = vmatprep.mubr.bf16.mxu0 0
      %1075 = vmatmul.mubr.bf16.gmra.mrb[0].mxu0 %v862
      %v1076 = vpop.f32.mrb[0].mxu0
      %v1077 = vadd.f32 %v888, %v1076
      %v1078 = vpop.f32.mrb[0].mxu0
      %v1079 = vpop.f32.mrb[0].mxu0
      %v1080 = vadd.f32 %v888, %v1079
      %v1081 = vpop.f32.mrb[0].mxu0
      %1082 = vmatprep.mubr.bf16.mxu0 0
      %1083 = vmatmul.mubr.bf16.gmra.mrb[0].mxu0 %v863
      %v1084 = vpop.f32.mrb[0].mxu0
      %v1085 = vadd.f32 %v888, %v1084
      %v1086 = vpop.f32.mrb[0].mxu0
      %v1087 = vpop.f32.mrb[0].mxu0
      %v1088 = vadd.f32 %v888, %v1087
      %v1089 = vpop.f32.mrb[0].mxu0
      %1090 = vmatprep.mubr.bf16.mxu0 0
      %1091 = vmatmul.mubr.bf16.gmra.mrb[0].mxu0 %v864
      %v1092 = vpop.f32.mrb[0].mxu0
      %v1093 = vadd.f32 %v888, %v1092
      %v1094 = vpop.f32.mrb[0].mxu0
      %v1095 = vpop.f32.mrb[0].mxu0
      %v1096 = vadd.f32 %v888, %v1095
      %v1097 = vpop.f32.mrb[0].mxu0
      %1098 = vdwg.mxu0
      %v1099 = vmul.f32 %v973, 0.2
      %v1100 = vmul.f32 %v976, 0.2
      %v1101 = vmul.f32 %v981, 0.2
      %v1102 = vmul.f32 %v984, 0.2
      %v1103 = vmul.f32 %v989, 0.2
      %v1104 = vmul.f32 %v992, 0.2
      %v1105 = vmul.f32 %v997, 0.2
      %v1106 = vmul.f32 %v1000, 0.2
      %v1107 = vmul.f32 %v1005, 0.2
      %v1108 = vmul.f32 %v1008, 0.2
      %v1109 = vmul.f32 %v1013, 0.2
      %v1110 = vmul.f32 %v1016, 0.2
      %v1111 = vmul.f32 %v1021, 0.2
      %v1112 = vmul.f32 %v1024, 0.2
      %v1113 = vmul.f32 %v1029, 0.2
      %v1114 = vmul.f32 %v1032, 0.2
      %v1115 = vmul.f32 %v1037, 0.2
      %v1116 = vmul.f32 %v1040, 0.2
      %v1117 = vmul.f32 %v1045, 0.2
      %v1118 = vmul.f32 %v1048, 0.2
      %v1119 = vmul.f32 %v1053, 0.2
      %v1120 = vmul.f32 %v1056, 0.2
      %v1121 = vmul.f32 %v1061, 0.2
      %v1122 = vmul.f32 %v1064, 0.2
      %v1123 = vmul.f32 %v1069, 0.2
      %v1124 = vmul.f32 %v1072, 0.2
      %v1125 = vmul.f32 %v1077, 0.2
      %v1126 = vmul.f32 %v1080, 0.2
      %v1127 = vmul.f32 %v1085, 0.2
      %v1128 = vmul.f32 %v1088, 0.2
      %v1129 = vmul.f32 %v1093, 0.2
      %v1130 = vmul.f32 %v1096, 0.2
      %v1131 = vmax.f32 %v973, %v1099
      %v1132 = vmax.f32 %v976, %v1100
      %v1133 = vmax.f32 %v981, %v1101
      %v1134 = vmax.f32 %v984, %v1102
      %v1135 = vmax.f32 %v989, %v1103
      %v1136 = vmax.f32 %v992, %v1104
      %v1137 = vmax.f32 %v997, %v1105
      %v1138 = vmax.f32 %v1000, %v1106
      %v1139 = vmax.f32 %v1005, %v1107
      %v1140 = vmax.f32 %v1008, %v1108
      %v1141 = vmax.f32 %v1013, %v1109
      %v1142 = vmax.f32 %v1016, %v1110
      %v1143 = vmax.f32 %v1021, %v1111
      %v1144 = vmax.f32 %v1024, %v1112
      %v1145 = vmax.f32 %v1029, %v1113
      %v1146 = vmax.f32 %v1032, %v1114
      %v1147 = vmax.f32 %v1037, %v1115
      %v1148 = vmax.f32 %v1040, %v1116
      %v1149 = vmax.f32 %v1045, %v1117
      %v1150 = vmax.f32 %v1048, %v1118
      %v1151 = vmax.f32 %v1053, %v1119
      %v1152 = vmax.f32 %v1056, %v1120
      %v1153 = vmax.f32 %v1061, %v1121
      %v1154 = vmax.f32 %v1064, %v1122
      %v1155 = vmax.f32 %v1069, %v1123
      %v1156 = vmax.f32 %v1072, %v1124
      %v1157 = vmax.f32 %v1077, %v1125
      %v1158 = vmax.f32 %v1080, %v1126
      %v1159 = vmax.f32 %v1085, %v1127
      %v1160 = vmax.f32 %v1088, %v1128
      %v1161 = vmax.f32 %v1093, %v1129
      %v1162 = vmax.f32 %v1096, %v1130
      %v1163 = vpack.c.bf16 %v1132, %v1131
      %v1164 = vpack.c.bf16 %v1134, %v1133
      %v1165 = vpack.c.bf16 %v1136, %v1135
      %v1166 = vpack.c.bf16 %v1138, %v1137
      %v1167 = vpack.c.bf16 %v1140, %v1139
      %v1168 = vpack.c.bf16 %v1142, %v1141
      %v1169 = vpack.c.bf16 %v1144, %v1143
      %v1170 = vpack.c.bf16 %v1146, %v1145
      %v1171 = vpack.c.bf16 %v1148, %v1147
      %v1172 = vpack.c.bf16 %v1150, %v1149
      %v1173 = vpack.c.bf16 %v1152, %v1151
      %v1174 = vpack.c.bf16 %v1154, %v1153
      %v1175 = vpack.c.bf16 %v1156, %v1155
      %v1176 = vpack.c.bf16 %v1158, %v1157
      %v1177 = vpack.c.bf16 %v1160, %v1159
      %v1178 = vpack.c.bf16 %v1162, %v1161
      %s1179 = scalar_lea.vmem %s2, 128
      %v1180 = vld [vmem:[%s1179] sm:$0xf]
      %v1181 = vld [vmem:[%s1179 + $0x4] sm:$0xf]
      %v1182 = vld [vmem:[%s1179 + $0x8] sm:$0xf]
      %v1183 = vld [vmem:[%s1179 + $0xc] sm:$0xf]
      %v1184 = vld [vmem:[%s1179 + $0x10] sm:$0xf]
      %v1185 = vld [vmem:[%s1179 + $0x14] sm:$0xf]
      %v1186 = vld [vmem:[%s1179 + $0x18] sm:$0xf]
      %v1187 = vld [vmem:[%s1179 + $0x1c] sm:$0xf]
      %v1188 = vld [vmem:[%s1179 + $0x20] sm:$0xf]
      %v1189 = vld [vmem:[%s1179 + $0x24] sm:$0xf]
      %v1190 = vld [vmem:[%s1179 + $0x28] sm:$0xf]
      %v1191 = vld [vmem:[%s1179 + $0x2c] sm:$0xf]
      %v1192 = vld [vmem:[%s1179 + $0x30] sm:$0xf]
      %v1193 = vld [vmem:[%s1179 + $0x34] sm:$0xf]
      %v1194 = vld [vmem:[%s1179 + $0x38] sm:$0xf]
      %v1195 = vld [vmem:[%s1179 + $0x3c] sm:$0xf]
      %s1196 = scalar_lea.vmem %s3, 3
      %v1197 = vld [vmem:[%s1196] sm:$0x1]
      %v1199 = vlaneseq
      %v1200 = vshrl.u32 %v1199, 7
      %v1201 = vsub.s32 0, %v1200
      %v1202 = vrot.slane %v1197, %v1201
      %v1220 = vunpack.c.l.b16 %v1180
      %v1221 = vunpack.c.l.b16 %v1181
      %v1222 = vunpack.c.l.b16 %v1182
      %v1223 = vunpack.c.l.b16 %v1183
      %v1224 = vunpack.c.l.b16 %v1184
      %v1225 = vunpack.c.l.b16 %v1185
      %v1226 = vunpack.c.l.b16 %v1186
      %v1227 = vunpack.c.l.b16 %v1187
      %v1228 = vunpack.c.l.b16 %v1188
      %v1229 = vunpack.c.l.b16 %v1189
      %v1230 = vunpack.c.l.b16 %v1190
      %v1231 = vunpack.c.l.b16 %v1191
      %v1232 = vunpack.c.l.b16 %v1192
      %v1233 = vunpack.c.l.b16 %v1193
      %v1234 = vunpack.c.l.b16 %v1194
      %v1235 = vunpack.c.l.b16 %v1195
      %v1236 = vpack.c.b16 %v1221, %v1220
      %v1237 = vpack.c.b16 %v1223, %v1222
      %v1238 = vpack.c.b16 %v1225, %v1224
      %v1239 = vpack.c.b16 %v1227, %v1226
      %v1240 = vpack.c.b16 %v1229, %v1228
      %v1241 = vpack.c.b16 %v1231, %v1230
      %v1242 = vpack.c.b16 %v1233, %v1232
      %v1243 = vpack.c.b16 %v1235, %v1234
      %1252 = vmatprep.subr.bf16.mxu0 0
      %1253 = vmatpush1.bf16.msra.mxu0 %v1236
      %1254 = vmatprep.subr.bf16.mxu0 0
      %1255 = vmatpush1.bf16.msra.mxu0 %v1237
      %1256 = vmatprep.subr.bf16.mxu0 0
      %1257 = vmatpush1.bf16.msra.mxu0 %v1238
      %1258 = vmatprep.subr.bf16.mxu0 0
      %1259 = vmatpush1.bf16.msra.mxu0 %v1239
      %1260 = vmatprep.subr.bf16.mxu0 0
      %1261 = vmatpush1.bf16.msra.mxu0 %v1240
      %1262 = vmatprep.subr.bf16.mxu0 0
      %1263 = vmatpush1.bf16.msra.mxu0 %v1241
      %1264 = vmatprep.subr.bf16.mxu0 0
      %1265 = vmatpush1.bf16.msra.mxu0 %v1242
      %1266 = vmatprep.subr.bf16.mxu0 0
      %1267 = vmatpush1.bf16.msra.mxu0 %v1243
      %1268 = vmatprep.subr.bf16.mxu0 0
      %1269 = vmatpush1.bf16.msra.mxu0 0
      %1270 = vmatprep.subr.bf16.mxu0 0
      %1271 = vmatpush1.bf16.msra.mxu0 0
      %1272 = vmatprep.subr.bf16.mxu0 0
      %1273 = vmatpush1.bf16.msra.mxu0 0
      %1274 = vmatprep.subr.bf16.mxu0 0
      %1275 = vmatpush1.bf16.msra.mxu0 0
      %1276 = vmatprep.subr.bf16.mxu0 0
      %1277 = vmatpush1.bf16.msra.mxu0 0
      %1278 = vmatprep.subr.bf16.mxu0 0
      %1279 = vmatpush1.bf16.msra.mxu0 0
      %1280 = vmatprep.subr.bf16.mxu0 0
      %1281 = vmatpush1.bf16.msra.mxu0 0
      %1282 = vmatprep.subr.bf16.mxu0 0
      %1283 = vmatpush1.bf16.msra.mxu0 0
      %1284 = vmatprep.mubr.bf16.mxu0 0
      %1285 = vmatmul.mubr.bf16.gmra.mrb[0].mxu0 %v1163
      %v1286 = vpop.f32.mrb[0].mxu0
      %v1287 = vadd.f32 %v1202, %v1286
      %v1288 = vpop.f32.mrb[0].mxu0
      %v1289 = vpop.f32.mrb[0].mxu0
      %v1290 = vadd.f32 %v1202, %v1289
      %v1291 = vpop.f32.mrb[0].mxu0
      %1292 = vmatprep.mubr.bf16.mxu0 0
      %1293 = vmatmul.mubr.bf16.gmra.mrb[0].mxu0 %v1164
      %v1294 = vpop.f32.mrb[0].mxu0
      %v1295 = vadd.f32 %v1202, %v1294
      %v1296 = vpop.f32.mrb[0].mxu0
      %v1297 = vpop.f32.mrb[0].mxu0
      %v1298 = vadd.f32 %v1202, %v1297
      %v1299 = vpop.f32.mrb[0].mxu0
      %1300 = vmatprep.mubr.bf16.mxu0 0
      %1301 = vmatmul.mubr.bf16.gmra.mrb[0].mxu0 %v1165
      %v1302 = vpop.f32.mrb[0].mxu0
      %v1303 = vadd.f32 %v1202, %v1302
      %v1304 = vpop.f32.mrb[0].mxu0
      %v1305 = vpop.f32.mrb[0].mxu0
      %v1306 = vadd.f32 %v1202, %v1305
      %v1307 = vpop.f32.mrb[0].mxu0
      %1308 = vmatprep.mubr.bf16.mxu0 0
      %1309 = vmatmul.mubr.bf16.gmra.mrb[0].mxu0 %v1166
      %v1310 = vpop.f32.mrb[0].mxu0
      %v1311 = vadd.f32 %v1202, %v1310
      %v1312 = vpop.f32.mrb[0].mxu0
      %v1313 = vpop.f32.mrb[0].mxu0
      %v1314 = vadd.f32 %v1202, %v1313
      %v1315 = vpop.f32.mrb[0].mxu0
      %1316 = vmatprep.mubr.bf16.mxu0 0
      %1317 = vmatmul.mubr.bf16.gmra.mrb[0].mxu0 %v1167
      %v1318 = vpop.f32.mrb[0].mxu0
      %v1319 = vadd.f32 %v1202, %v1318
      %v1320 = vpop.f32.mrb[0].mxu0
      %v1321 = vpop.f32.mrb[0].mxu0
      %v1322 = vadd.f32 %v1202, %v1321
      %v1323 = vpop.f32.mrb[0].mxu0
      %1324 = vmatprep.mubr.bf16.mxu0 0
      %1325 = vmatmul.mubr.bf16.gmra.mrb[0].mxu0 %v1168
      %v1326 = vpop.f32.mrb[0].mxu0
      %v1327 = vadd.f32 %v1202, %v1326
      %v1328 = vpop.f32.mrb[0].mxu0
      %v1329 = vpop.f32.mrb[0].mxu0
      %v1330 = vadd.f32 %v1202, %v1329
      %v1331 = vpop.f32.mrb[0].mxu0
      %1332 = vmatprep.mubr.bf16.mxu0 0
      %1333 = vmatmul.mubr.bf16.gmra.mrb[0].mxu0 %v1169
      %v1334 = vpop.f32.mrb[0].mxu0
      %v1335 = vadd.f32 %v1202, %v1334
      %v1336 = vpop.f32.mrb[0].mxu0
      %v1337 = vpop.f32.mrb[0].mxu0
      %v1338 = vadd.f32 %v1202, %v1337
      %v1339 = vpop.f32.mrb[0].mxu0
      %1340 = vmatprep.mubr.bf16.mxu0 0
      %1341 = vmatmul.mubr.bf16.gmra.mrb[0].mxu0 %v1170
      %v1342 = vpop.f32.mrb[0].mxu0
      %v1343 = vadd.f32 %v1202, %v1342
      %v1344 = vpop.f32.mrb[0].mxu0
      %v1345 = vpop.f32.mrb[0].mxu0
      %v1346 = vadd.f32 %v1202, %v1345
      %v1347 = vpop.f32.mrb[0].mxu0
      %1348 = vmatprep.mubr.bf16.mxu0 0
      %1349 = vmatmul.mubr.bf16.gmra.mrb[0].mxu0 %v1171
      %v1350 = vpop.f32.mrb[0].mxu0
      %v1351 = vadd.f32 %v1202, %v1350
      %v1352 = vpop.f32.mrb[0].mxu0
      %v1353 = vpop.f32.mrb[0].mxu0
      %v1354 = vadd.f32 %v1202, %v1353
      %v1355 = vpop.f32.mrb[0].mxu0
      %1356 = vmatprep.mubr.bf16.mxu0 0
      %1357 = vmatmul.mubr.bf16.gmra.mrb[0].mxu0 %v1172
      %v1358 = vpop.f32.mrb[0].mxu0
      %v1359 = vadd.f32 %v1202, %v1358
      %v1360 = vpop.f32.mrb[0].mxu0
      %v1361 = vpop.f32.mrb[0].mxu0
      %v1362 = vadd.f32 %v1202, %v1361
      %v1363 = vpop.f32.mrb[0].mxu0
      %1364 = vmatprep.mubr.bf16.mxu0 0
      %1365 = vmatmul.mubr.bf16.gmra.mrb[0].mxu0 %v1173
      %v1366 = vpop.f32.mrb[0].mxu0
      %v1367 = vadd.f32 %v1202, %v1366
      %v1368 = vpop.f32.mrb[0].mxu0
      %v1369 = vpop.f32.mrb[0].mxu0
      %v1370 = vadd.f32 %v1202, %v1369
      %v1371 = vpop.f32.mrb[0].mxu0
      %1372 = vmatprep.mubr.bf16.mxu0 0
      %1373 = vmatmul.mubr.bf16.gmra.mrb[0].mxu0 %v1174
      %v1374 = vpop.f32.mrb[0].mxu0
      %v1375 = vadd.f32 %v1202, %v1374
      %v1376 = vpop.f32.mrb[0].mxu0
      %v1377 = vpop.f32.mrb[0].mxu0
      %v1378 = vadd.f32 %v1202, %v1377
      %v1379 = vpop.f32.mrb[0].mxu0
      %1380 = vmatprep.mubr.bf16.mxu0 0
      %1381 = vmatmul.mubr.bf16.gmra.mrb[0].mxu0 %v1175
      %v1382 = vpop.f32.mrb[0].mxu0
      %v1383 = vadd.f32 %v1202, %v1382
      %v1384 = vpop.f32.mrb[0].mxu0
      %v1385 = vpop.f32.mrb[0].mxu0
      %v1386 = vadd.f32 %v1202, %v1385
      %v1387 = vpop.f32.mrb[0].mxu0
      %1388 = vmatprep.mubr.bf16.mxu0 0
      %1389 = vmatmul.mubr.bf16.gmra.mrb[0].mxu0 %v1176
      %v1390 = vpop.f32.mrb[0].mxu0
      %v1391 = vadd.f32 %v1202, %v1390
      %v1392 = vpop.f32.mrb[0].mxu0
      %v1393 = vpop.f32.mrb[0].mxu0
      %v1394 = vadd.f32 %v1202, %v1393
      %v1395 = vpop.f32.mrb[0].mxu0
      %1396 = vmatprep.mubr.bf16.mxu0 0
      %1397 = vmatmul.mubr.bf16.gmra.mrb[0].mxu0 %v1177
      %v1398 = vpop.f32.mrb[0].mxu0
      %v1399 = vadd.f32 %v1202, %v1398
      %v1400 = vpop.f32.mrb[0].mxu0
      %v1401 = vpop.f32.mrb[0].mxu0
      %v1402 = vadd.f32 %v1202, %v1401
      %v1403 = vpop.f32.mrb[0].mxu0
      %1404 = vmatprep.mubr.bf16.mxu0 0
      %1405 = vmatmul.mubr.bf16.gmra.mrb[0].mxu0 %v1178
      %v1406 = vpop.f32.mrb[0].mxu0
      %v1407 = vadd.f32 %v1202, %v1406
      %v1408 = vpop.f32.mrb[0].mxu0
      %v1409 = vpop.f32.mrb[0].mxu0
      %v1410 = vadd.f32 %v1202, %v1409
      %v1411 = vpop.f32.mrb[0].mxu0
      %1412 = vdwg.mxu0
      %v1413 = vmul.f32 %v1287, 0.2
      %v1414 = vmul.f32 %v1290, 0.2
      %v1415 = vmul.f32 %v1295, 0.2
      %v1416 = vmul.f32 %v1298, 0.2
      %v1417 = vmul.f32 %v1303, 0.2
      %v1418 = vmul.f32 %v1306, 0.2
      %v1419 = vmul.f32 %v1311, 0.2
      %v1420 = vmul.f32 %v1314, 0.2
      %v1421 = vmul.f32 %v1319, 0.2
      %v1422 = vmul.f32 %v1322, 0.2
      %v1423 = vmul.f32 %v1327, 0.2
      %v1424 = vmul.f32 %v1330, 0.2
      %v1425 = vmul.f32 %v1335, 0.2
      %v1426 = vmul.f32 %v1338, 0.2
      %v1427 = vmul.f32 %v1343, 0.2
      %v1428 = vmul.f32 %v1346, 0.2
      %v1429 = vmul.f32 %v1351, 0.2
      %v1430 = vmul.f32 %v1354, 0.2
      %v1431 = vmul.f32 %v1359, 0.2
      %v1432 = vmul.f32 %v1362, 0.2
      %v1433 = vmul.f32 %v1367, 0.2
      %v1434 = vmul.f32 %v1370, 0.2
      %v1435 = vmul.f32 %v1375, 0.2
      %v1436 = vmul.f32 %v1378, 0.2
      %v1437 = vmul.f32 %v1383, 0.2
      %v1438 = vmul.f32 %v1386, 0.2
      %v1439 = vmul.f32 %v1391, 0.2
      %v1440 = vmul.f32 %v1394, 0.2
      %v1441 = vmul.f32 %v1399, 0.2
      %v1442 = vmul.f32 %v1402, 0.2
      %v1443 = vmul.f32 %v1407, 0.2
      %v1444 = vmul.f32 %v1410, 0.2
      %v1445 = vmax.f32 %v1287, %v1413
      %v1446 = vmax.f32 %v1290, %v1414
      %v1447 = vmax.f32 %v1295, %v1415
      %v1448 = vmax.f32 %v1298, %v1416
      %v1449 = vmax.f32 %v1303, %v1417
      %v1450 = vmax.f32 %v1306, %v1418
      %v1451 = vmax.f32 %v1311, %v1419
      %v1452 = vmax.f32 %v1314, %v1420
      %v1453 = vmax.f32 %v1319, %v1421
      %v1454 = vmax.f32 %v1322, %v1422
      %v1455 = vmax.f32 %v1327, %v1423
      %v1456 = vmax.f32 %v1330, %v1424
      %v1457 = vmax.f32 %v1335, %v1425
      %v1458 = vmax.f32 %v1338, %v1426
      %v1459 = vmax.f32 %v1343, %v1427
      %v1460 = vmax.f32 %v1346, %v1428
      %v1461 = vmax.f32 %v1351, %v1429
      %v1462 = vmax.f32 %v1354, %v1430
      %v1463 = vmax.f32 %v1359, %v1431
      %v1464 = vmax.f32 %v1362, %v1432
      %v1465 = vmax.f32 %v1367, %v1433
      %v1466 = vmax.f32 %v1370, %v1434
      %v1467 = vmax.f32 %v1375, %v1435
      %v1468 = vmax.f32 %v1378, %v1436
      %v1469 = vmax.f32 %v1383, %v1437
      %v1470 = vmax.f32 %v1386, %v1438
      %v1471 = vmax.f32 %v1391, %v1439
      %v1472 = vmax.f32 %v1394, %v1440
      %v1473 = vmax.f32 %v1399, %v1441
      %v1474 = vmax.f32 %v1402, %v1442
      %v1475 = vmax.f32 %v1407, %v1443
      %v1476 = vmax.f32 %v1410, %v1444
      %v1477 = vpack.c.bf16 %v1446, %v1445
      %v1478 = vpack.c.bf16 %v1448, %v1447
      %v1479 = vpack.c.bf16 %v1450, %v1449
      %v1480 = vpack.c.bf16 %v1452, %v1451
      %v1481 = vpack.c.bf16 %v1454, %v1453
      %v1482 = vpack.c.bf16 %v1456, %v1455
      %v1483 = vpack.c.bf16 %v1458, %v1457
      %v1484 = vpack.c.bf16 %v1460, %v1459
      %v1485 = vpack.c.bf16 %v1462, %v1461
      %v1486 = vpack.c.bf16 %v1464, %v1463
      %v1487 = vpack.c.bf16 %v1466, %v1465
      %v1488 = vpack.c.bf16 %v1468, %v1467
      %v1489 = vpack.c.bf16 %v1470, %v1469
      %v1490 = vpack.c.bf16 %v1472, %v1471
      %v1491 = vpack.c.bf16 %v1474, %v1473
      %v1492 = vpack.c.bf16 %v1476, %v1475
      %s1493 = scalar_lea.vmem %s2, 192
      %v1494 = vld [vmem:[%s1493] sm:$0xf]
      %v1495 = vld [vmem:[%s1493 + $0x4] sm:$0xf]
      %v1496 = vld [vmem:[%s1493 + $0x8] sm:$0xf]
      %v1497 = vld [vmem:[%s1493 + $0xc] sm:$0xf]
      %v1498 = vld [vmem:[%s1493 + $0x10] sm:$0xf]
      %v1499 = vld [vmem:[%s1493 + $0x14] sm:$0xf]
      %v1500 = vld [vmem:[%s1493 + $0x18] sm:$0xf]
      %v1501 = vld [vmem:[%s1493 + $0x1c] sm:$0xf]
      %v1502 = vld [vmem:[%s1493 + $0x20] sm:$0xf]
      %v1503 = vld [vmem:[%s1493 + $0x24] sm:$0xf]
      %v1504 = vld [vmem:[%s1493 + $0x28] sm:$0xf]
      %v1505 = vld [vmem:[%s1493 + $0x2c] sm:$0xf]
      %v1506 = vld [vmem:[%s1493 + $0x30] sm:$0xf]
      %v1507 = vld [vmem:[%s1493 + $0x34] sm:$0xf]
      %v1508 = vld [vmem:[%s1493 + $0x38] sm:$0xf]
      %v1509 = vld [vmem:[%s1493 + $0x3c] sm:$0xf]
      %s1510 = scalar_lea.vmem %s3, 4
      %v1511 = vld [vmem:[%s1510] sm:$0x1]
      %v1513 = vlaneseq
      %v1514 = vshrl.u32 %v1513, 7
      %v1515 = vsub.s32 0, %v1514
      %v1516 = vrot.slane %v1511, %v1515
      %v1534 = vunpack.c.l.b16 %v1494
      %v1535 = vunpack.c.l.b16 %v1495
      %v1536 = vunpack.c.l.b16 %v1496
      %v1537 = vunpack.c.l.b16 %v1497
      %v1538 = vunpack.c.l.b16 %v1498
      %v1539 = vunpack.c.l.b16 %v1499
      %v1540 = vunpack.c.l.b16 %v1500
      %v1541 = vunpack.c.l.b16 %v1501
      %v1542 = vunpack.c.l.b16 %v1502
      %v1543 = vunpack.c.l.b16 %v1503
      %v1544 = vunpack.c.l.b16 %v1504
      %v1545 = vunpack.c.l.b16 %v1505
      %v1546 = vunpack.c.l.b16 %v1506
      %v1547 = vunpack.c.l.b16 %v1507
      %v1548 = vunpack.c.l.b16 %v1508
      %v1549 = vunpack.c.l.b16 %v1509
      %v1550 = vpack.c.b16 %v1535, %v1534
      %v1551 = vpack.c.b16 %v1537, %v1536
      %v1552 = vpack.c.b16 %v1539, %v1538
      %v1553 = vpack.c.b16 %v1541, %v1540
      %v1554 = vpack.c.b16 %v1543, %v1542
      %v1555 = vpack.c.b16 %v1545, %v1544
      %v1556 = vpack.c.b16 %v1547, %v1546
      %v1557 = vpack.c.b16 %v1549, %v1548
      %1566 = vmatprep.subr.bf16.mxu0 0
      %1567 = vmatpush1.bf16.msra.mxu0 %v1550
      %1568 = vmatprep.subr.bf16.mxu0 0
      %1569 = vmatpush1.bf16.msra.mxu0 %v1551
      %1570 = vmatprep.subr.bf16.mxu0 0
      %1571 = vmatpush1.bf16.msra.mxu0 %v1552
      %1572 = vmatprep.subr.bf16.mxu0 0
      %1573 = vmatpush1.bf16.msra.mxu0 %v1553
      %1574 = vmatprep.subr.bf16.mxu0 0
      %1575 = vmatpush1.bf16.msra.mxu0 %v1554
      %1576 = vmatprep.subr.bf16.mxu0 0
      %1577 = vmatpush1.bf16.msra.mxu0 %v1555
      %1578 = vmatprep.subr.bf16.mxu0 0
      %1579 = vmatpush1.bf16.msra.mxu0 %v1556
      %1580 = vmatprep.subr.bf16.mxu0 0
      %1581 = vmatpush1.bf16.msra.mxu0 %v1557
      %1582 = vmatprep.subr.bf16.mxu0 0
      %1583 = vmatpush1.bf16.msra.mxu0 0
      %1584 = vmatprep.subr.bf16.mxu0 0
      %1585 = vmatpush1.bf16.msra.mxu0 0
      %1586 = vmatprep.subr.bf16.mxu0 0
      %1587 = vmatpush1.bf16.msra.mxu0 0
      %1588 = vmatprep.subr.bf16.mxu0 0
      %1589 = vmatpush1.bf16.msra.mxu0 0
      %1590 = vmatprep.subr.bf16.mxu0 0
      %1591 = vmatpush1.bf16.msra.mxu0 0
      %1592 = vmatprep.subr.bf16.mxu0 0
      %1593 = vmatpush1.bf16.msra.mxu0 0
      %1594 = vmatprep.subr.bf16.mxu0 0
      %1595 = vmatpush1.bf16.msra.mxu0 0
      %1596 = vmatprep.subr.bf16.mxu0 0
      %1597 = vmatpush1.bf16.msra.mxu0 0
      %1598 = vmatprep.mubr.bf16.mxu0 0
      %1599 = vmatmul.mubr.bf16.gmra.mrb[0].mxu0 %v1477
      %v1600 = vpop.f32.mrb[0].mxu0
      %v1601 = vadd.f32 %v1516, %v1600
      %v1602 = vpop.f32.mrb[0].mxu0
      %v1603 = vpop.f32.mrb[0].mxu0
      %v1604 = vadd.f32 %v1516, %v1603
      %v1605 = vpop.f32.mrb[0].mxu0
      %1606 = vmatprep.mubr.bf16.mxu0 0
      %1607 = vmatmul.mubr.bf16.gmra.mrb[0].mxu0 %v1478
      %v1608 = vpop.f32.mrb[0].mxu0
      %v1609 = vadd.f32 %v1516, %v1608
      %v1610 = vpop.f32.mrb[0].mxu0
      %v1611 = vpop.f32.mrb[0].mxu0
      %v1612 = vadd.f32 %v1516, %v1611
      %v1613 = vpop.f32.mrb[0].mxu0
      %1614 = vmatprep.mubr.bf16.mxu0 0
      %1615 = vmatmul.mubr.bf16.gmra.mrb[0].mxu0 %v1479
      %v1616 = vpop.f32.mrb[0].mxu0
      %v1617 = vadd.f32 %v1516, %v1616
      %v1618 = vpop.f32.mrb[0].mxu0
      %v1619 = vpop.f32.mrb[0].mxu0
      %v1620 = vadd.f32 %v1516, %v1619
      %v1621 = vpop.f32.mrb[0].mxu0
      %1622 = vmatprep.mubr.bf16.mxu0 0
      %1623 = vmatmul.mubr.bf16.gmra.mrb[0].mxu0 %v1480
      %v1624 = vpop.f32.mrb[0].mxu0
      %v1625 = vadd.f32 %v1516, %v1624
      %v1626 = vpop.f32.mrb[0].mxu0
      %v1627 = vpop.f32.mrb[0].mxu0
      %v1628 = vadd.f32 %v1516, %v1627
      %v1629 = vpop.f32.mrb[0].mxu0
      %1630 = vmatprep.mubr.bf16.mxu0 0
      %1631 = vmatmul.mubr.bf16.gmra.mrb[0].mxu0 %v1481
      %v1632 = vpop.f32.mrb[0].mxu0
      %v1633 = vadd.f32 %v1516, %v1632
      %v1634 = vpop.f32.mrb[0].mxu0
      %v1635 = vpop.f32.mrb[0].mxu0
      %v1636 = vadd.f32 %v1516, %v1635
      %v1637 = vpop.f32.mrb[0].mxu0
      %1638 = vmatprep.mubr.bf16.mxu0 0
      %1639 = vmatmul.mubr.bf16.gmra.mrb[0].mxu0 %v1482
      %v1640 = vpop.f32.mrb[0].mxu0
      %v1641 = vadd.f32 %v1516, %v1640
      %v1642 = vpop.f32.mrb[0].mxu0
      %v1643 = vpop.f32.mrb[0].mxu0
      %v1644 = vadd.f32 %v1516, %v1643
      %v1645 = vpop.f32.mrb[0].mxu0
      %1646 = vmatprep.mubr.bf16.mxu0 0
      %1647 = vmatmul.mubr.bf16.gmra.mrb[0].mxu0 %v1483
      %v1648 = vpop.f32.mrb[0].mxu0
      %v1649 = vadd.f32 %v1516, %v1648
      %v1650 = vpop.f32.mrb[0].mxu0
      %v1651 = vpop.f32.mrb[0].mxu0
      %v1652 = vadd.f32 %v1516, %v1651
      %v1653 = vpop.f32.mrb[0].mxu0
      %1654 = vmatprep.mubr.bf16.mxu0 0
      %1655 = vmatmul.mubr.bf16.gmra.mrb[0].mxu0 %v1484
      %v1656 = vpop.f32.mrb[0].mxu0
      %v1657 = vadd.f32 %v1516, %v1656
      %v1658 = vpop.f32.mrb[0].mxu0
      %v1659 = vpop.f32.mrb[0].mxu0
      %v1660 = vadd.f32 %v1516, %v1659
      %v1661 = vpop.f32.mrb[0].mxu0
      %1662 = vmatprep.mubr.bf16.mxu0 0
      %1663 = vmatmul.mubr.bf16.gmra.mrb[0].mxu0 %v1485
      %v1664 = vpop.f32.mrb[0].mxu0
      %v1665 = vadd.f32 %v1516, %v1664
      %v1666 = vpop.f32.mrb[0].mxu0
      %v1667 = vpop.f32.mrb[0].mxu0
      %v1668 = vadd.f32 %v1516, %v1667
      %v1669 = vpop.f32.mrb[0].mxu0
      %1670 = vmatprep.mubr.bf16.mxu0 0
      %1671 = vmatmul.mubr.bf16.gmra.mrb[0].mxu0 %v1486
      %v1672 = vpop.f32.mrb[0].mxu0
      %v1673 = vadd.f32 %v1516, %v1672
      %v1674 = vpop.f32.mrb[0].mxu0
      %v1675 = vpop.f32.mrb[0].mxu0
      %v1676 = vadd.f32 %v1516, %v1675
      %v1677 = vpop.f32.mrb[0].mxu0
      %1678 = vmatprep.mubr.bf16.mxu0 0
      %1679 = vmatmul.mubr.bf16.gmra.mrb[0].mxu0 %v1487
      %v1680 = vpop.f32.mrb[0].mxu0
      %v1681 = vadd.f32 %v1516, %v1680
      %v1682 = vpop.f32.mrb[0].mxu0
      %v1683 = vpop.f32.mrb[0].mxu0
      %v1684 = vadd.f32 %v1516, %v1683
      %v1685 = vpop.f32.mrb[0].mxu0
      %1686 = vmatprep.mubr.bf16.mxu0 0
      %1687 = vmatmul.mubr.bf16.gmra.mrb[0].mxu0 %v1488
      %v1688 = vpop.f32.mrb[0].mxu0
      %v1689 = vadd.f32 %v1516, %v1688
      %v1690 = vpop.f32.mrb[0].mxu0
      %v1691 = vpop.f32.mrb[0].mxu0
      %v1692 = vadd.f32 %v1516, %v1691
      %v1693 = vpop.f32.mrb[0].mxu0
      %1694 = vmatprep.mubr.bf16.mxu0 0
      %1695 = vmatmul.mubr.bf16.gmra.mrb[0].mxu0 %v1489
      %v1696 = vpop.f32.mrb[0].mxu0
      %v1697 = vadd.f32 %v1516, %v1696
      %v1698 = vpop.f32.mrb[0].mxu0
      %v1699 = vpop.f32.mrb[0].mxu0
      %v1700 = vadd.f32 %v1516, %v1699
      %v1701 = vpop.f32.mrb[0].mxu0
      %1702 = vmatprep.mubr.bf16.mxu0 0
      %1703 = vmatmul.mubr.bf16.gmra.mrb[0].mxu0 %v1490
      %v1704 = vpop.f32.mrb[0].mxu0
      %v1705 = vadd.f32 %v1516, %v1704
      %v1706 = vpop.f32.mrb[0].mxu0
      %v1707 = vpop.f32.mrb[0].mxu0
      %v1708 = vadd.f32 %v1516, %v1707
      %v1709 = vpop.f32.mrb[0].mxu0
      %1710 = vmatprep.mubr.bf16.mxu0 0
      %1711 = vmatmul.mubr.bf16.gmra.mrb[0].mxu0 %v1491
      %v1712 = vpop.f32.mrb[0].mxu0
      %v1713 = vadd.f32 %v1516, %v1712
      %v1714 = vpop.f32.mrb[0].mxu0
      %v1715 = vpop.f32.mrb[0].mxu0
      %v1716 = vadd.f32 %v1516, %v1715
      %v1717 = vpop.f32.mrb[0].mxu0
      %1718 = vmatprep.mubr.bf16.mxu0 0
      %1719 = vmatmul.mubr.bf16.gmra.mrb[0].mxu0 %v1492
      %v1720 = vpop.f32.mrb[0].mxu0
      %v1721 = vadd.f32 %v1516, %v1720
      %v1722 = vpop.f32.mrb[0].mxu0
      %v1723 = vpop.f32.mrb[0].mxu0
      %v1724 = vadd.f32 %v1516, %v1723
      %v1725 = vpop.f32.mrb[0].mxu0
      %1726 = vdwg.mxu0
      %v1727 = vmul.f32 %v1601, 0.2
      %v1728 = vmul.f32 %v1604, 0.2
      %v1729 = vmul.f32 %v1609, 0.2
      %v1730 = vmul.f32 %v1612, 0.2
      %v1731 = vmul.f32 %v1617, 0.2
      %v1732 = vmul.f32 %v1620, 0.2
      %v1733 = vmul.f32 %v1625, 0.2
      %v1734 = vmul.f32 %v1628, 0.2
      %v1735 = vmul.f32 %v1633, 0.2
      %v1736 = vmul.f32 %v1636, 0.2
      %v1737 = vmul.f32 %v1641, 0.2
      %v1738 = vmul.f32 %v1644, 0.2
      %v1739 = vmul.f32 %v1649, 0.2
      %v1740 = vmul.f32 %v1652, 0.2
      %v1741 = vmul.f32 %v1657, 0.2
      %v1742 = vmul.f32 %v1660, 0.2
      %v1743 = vmul.f32 %v1665, 0.2
      %v1744 = vmul.f32 %v1668, 0.2
      %v1745 = vmul.f32 %v1673, 0.2
      %v1746 = vmul.f32 %v1676, 0.2
      %v1747 = vmul.f32 %v1681, 0.2
      %v1748 = vmul.f32 %v1684, 0.2
      %v1749 = vmul.f32 %v1689, 0.2
      %v1750 = vmul.f32 %v1692, 0.2
      %v1751 = vmul.f32 %v1697, 0.2
      %v1752 = vmul.f32 %v1700, 0.2
      %v1753 = vmul.f32 %v1705, 0.2
      %v1754 = vmul.f32 %v1708, 0.2
      %v1755 = vmul.f32 %v1713, 0.2
      %v1756 = vmul.f32 %v1716, 0.2
      %v1757 = vmul.f32 %v1721, 0.2
      %v1758 = vmul.f32 %v1724, 0.2
      %v1759 = vmax.f32 %v1601, %v1727
      %v1760 = vmax.f32 %v1604, %v1728
      %v1761 = vmax.f32 %v1609, %v1729
      %v1762 = vmax.f32 %v1612, %v1730
      %v1763 = vmax.f32 %v1617, %v1731
      %v1764 = vmax.f32 %v1620, %v1732
      %v1765 = vmax.f32 %v1625, %v1733
      %v1766 = vmax.f32 %v1628, %v1734
      %v1767 = vmax.f32 %v1633, %v1735
      %v1768 = vmax.f32 %v1636, %v1736
      %v1769 = vmax.f32 %v1641, %v1737
      %v1770 = vmax.f32 %v1644, %v1738
      %v1771 = vmax.f32 %v1649, %v1739
      %v1772 = vmax.f32 %v1652, %v1740
      %v1773 = vmax.f32 %v1657, %v1741
      %v1774 = vmax.f32 %v1660, %v1742
      %v1775 = vmax.f32 %v1665, %v1743
      %v1776 = vmax.f32 %v1668, %v1744
      %v1777 = vmax.f32 %v1673, %v1745
      %v1778 = vmax.f32 %v1676, %v1746
      %v1779 = vmax.f32 %v1681, %v1747
      %v1780 = vmax.f32 %v1684, %v1748
      %v1781 = vmax.f32 %v1689, %v1749
      %v1782 = vmax.f32 %v1692, %v1750
      %v1783 = vmax.f32 %v1697, %v1751
      %v1784 = vmax.f32 %v1700, %v1752
      %v1785 = vmax.f32 %v1705, %v1753
      %v1786 = vmax.f32 %v1708, %v1754
      %v1787 = vmax.f32 %v1713, %v1755
      %v1788 = vmax.f32 %v1716, %v1756
      %v1789 = vmax.f32 %v1721, %v1757
      %v1790 = vmax.f32 %v1724, %v1758
      %v1791 = vpack.c.bf16 %v1760, %v1759
      %v1792 = vpack.c.bf16 %v1762, %v1761
      %v1793 = vpack.c.bf16 %v1764, %v1763
      %v1794 = vpack.c.bf16 %v1766, %v1765
      %v1795 = vpack.c.bf16 %v1768, %v1767
      %v1796 = vpack.c.bf16 %v1770, %v1769
      %v1797 = vpack.c.bf16 %v1772, %v1771
      %v1798 = vpack.c.bf16 %v1774, %v1773
      %v1799 = vpack.c.bf16 %v1776, %v1775
      %v1800 = vpack.c.bf16 %v1778, %v1777
      %v1801 = vpack.c.bf16 %v1780, %v1779
      %v1802 = vpack.c.bf16 %v1782, %v1781
      %v1803 = vpack.c.bf16 %v1784, %v1783
      %v1804 = vpack.c.bf16 %v1786, %v1785
      %v1805 = vpack.c.bf16 %v1788, %v1787
      %v1806 = vpack.c.bf16 %v1790, %v1789
      %s1807 = scalar_lea.vmem %s2, 256
      %v1808 = vld [vmem:[%s1807] sm:$0xf]
      %v1809 = vld [vmem:[%s1807 + $0x4] sm:$0xf]
      %v1810 = vld [vmem:[%s1807 + $0x8] sm:$0xf]
      %v1811 = vld [vmem:[%s1807 + $0xc] sm:$0xf]
      %v1812 = vld [vmem:[%s1807 + $0x10] sm:$0xf]
      %v1813 = vld [vmem:[%s1807 + $0x14] sm:$0xf]
      %v1814 = vld [vmem:[%s1807 + $0x18] sm:$0xf]
      %v1815 = vld [vmem:[%s1807 + $0x1c] sm:$0xf]
      %v1816 = vld [vmem:[%s1807 + $0x20] sm:$0xf]
      %v1817 = vld [vmem:[%s1807 + $0x24] sm:$0xf]
      %v1818 = vld [vmem:[%s1807 + $0x28] sm:$0xf]
      %v1819 = vld [vmem:[%s1807 + $0x2c] sm:$0xf]
      %v1820 = vld [vmem:[%s1807 + $0x30] sm:$0xf]
      %v1821 = vld [vmem:[%s1807 + $0x34] sm:$0xf]
      %v1822 = vld [vmem:[%s1807 + $0x38] sm:$0xf]
      %v1823 = vld [vmem:[%s1807 + $0x3c] sm:$0xf]
      %s1824 = scalar_lea.vmem %s3, 5
      %v1825 = vld [vmem:[%s1824] sm:$0x1]
      %v1827 = vlaneseq
      %v1828 = vshrl.u32 %v1827, 7
      %v1829 = vsub.s32 0, %v1828
      %v1830 = vrot.slane %v1825, %v1829
      %v1848 = vunpack.c.l.b16 %v1808
      %v1849 = vunpack.c.l.b16 %v1809
      %v1850 = vunpack.c.l.b16 %v1810
      %v1851 = vunpack.c.l.b16 %v1811
      %v1852 = vunpack.c.l.b16 %v1812
      %v1853 = vunpack.c.l.b16 %v1813
      %v1854 = vunpack.c.l.b16 %v1814
      %v1855 = vunpack.c.l.b16 %v1815
      %v1856 = vunpack.c.l.b16 %v1816
      %v1857 = vunpack.c.l.b16 %v1817
      %v1858 = vunpack.c.l.b16 %v1818
      %v1859 = vunpack.c.l.b16 %v1819
      %v1860 = vunpack.c.l.b16 %v1820
      %v1861 = vunpack.c.l.b16 %v1821
      %v1862 = vunpack.c.l.b16 %v1822
      %v1863 = vunpack.c.l.b16 %v1823
      %v1864 = vpack.c.b16 %v1849, %v1848
      %v1865 = vpack.c.b16 %v1851, %v1850
      %v1866 = vpack.c.b16 %v1853, %v1852
      %v1867 = vpack.c.b16 %v1855, %v1854
      %v1868 = vpack.c.b16 %v1857, %v1856
      %v1869 = vpack.c.b16 %v1859, %v1858
      %v1870 = vpack.c.b16 %v1861, %v1860
      %v1871 = vpack.c.b16 %v1863, %v1862
      %1880 = vmatprep.subr.bf16.mxu0 0
      %1881 = vmatpush1.bf16.msra.mxu0 %v1864
      %1882 = vmatprep.subr.bf16.mxu0 0
      %1883 = vmatpush1.bf16.msra.mxu0 %v1865
      %1884 = vmatprep.subr.bf16.mxu0 0
      %1885 = vmatpush1.bf16.msra.mxu0 %v1866
      %1886 = vmatprep.subr.bf16.mxu0 0
      %1887 = vmatpush1.bf16.msra.mxu0 %v1867
      %1888 = vmatprep.subr.bf16.mxu0 0
      %1889 = vmatpush1.bf16.msra.mxu0 %v1868
      %1890 = vmatprep.subr.bf16.mxu0 0
      %1891 = vmatpush1.bf16.msra.mxu0 %v1869
      %1892 = vmatprep.subr.bf16.mxu0 0
      %1893 = vmatpush1.bf16.msra.mxu0 %v1870
      %1894 = vmatprep.subr.bf16.mxu0 0
      %1895 = vmatpush1.bf16.msra.mxu0 %v1871
      %1896 = vmatprep.subr.bf16.mxu0 0
      %1897 = vmatpush1.bf16.msra.mxu0 0
      %1898 = vmatprep.subr.bf16.mxu0 0
      %1899 = vmatpush1.bf16.msra.mxu0 0
      %1900 = vmatprep.subr.bf16.mxu0 0
      %1901 = vmatpush1.bf16.msra.mxu0 0
      %1902 = vmatprep.subr.bf16.mxu0 0
      %1903 = vmatpush1.bf16.msra.mxu0 0
      %1904 = vmatprep.subr.bf16.mxu0 0
      %1905 = vmatpush1.bf16.msra.mxu0 0
      %1906 = vmatprep.subr.bf16.mxu0 0
      %1907 = vmatpush1.bf16.msra.mxu0 0
      %1908 = vmatprep.subr.bf16.mxu0 0
      %1909 = vmatpush1.bf16.msra.mxu0 0
      %1910 = vmatprep.subr.bf16.mxu0 0
      %1911 = vmatpush1.bf16.msra.mxu0 0
      %1912 = vmatprep.mubr.bf16.mxu0 0
      %1913 = vmatmul.mubr.bf16.gmra.mrb[0].mxu0 %v1791
      %v1914 = vpop.f32.mrb[0].mxu0
      %v1915 = vadd.f32 %v1830, %v1914
      %v1916 = vpop.f32.mrb[0].mxu0
      %v1917 = vpop.f32.mrb[0].mxu0
      %v1918 = vadd.f32 %v1830, %v1917
      %v1919 = vpop.f32.mrb[0].mxu0
      %1920 = vmatprep.mubr.bf16.mxu0 0
      %1921 = vmatmul.mubr.bf16.gmra.mrb[0].mxu0 %v1792
      %v1922 = vpop.f32.mrb[0].mxu0
      %v1923 = vadd.f32 %v1830, %v1922
      %v1924 = vpop.f32.mrb[0].mxu0
      %v1925 = vpop.f32.mrb[0].mxu0
      %v1926 = vadd.f32 %v1830, %v1925
      %v1927 = vpop.f32.mrb[0].mxu0
      %1928 = vmatprep.mubr.bf16.mxu0 0
      %1929 = vmatmul.mubr.bf16.gmra.mrb[0].mxu0 %v1793
      %v1930 = vpop.f32.mrb[0].mxu0
      %v1931 = vadd.f32 %v1830, %v1930
      %v1932 = vpop.f32.mrb[0].mxu0
      %v1933 = vpop.f32.mrb[0].mxu0
      %v1934 = vadd.f32 %v1830, %v1933
      %v1935 = vpop.f32.mrb[0].mxu0
      %1936 = vmatprep.mubr.bf16.mxu0 0
      %1937 = vmatmul.mubr.bf16.gmra.mrb[0].mxu0 %v1794
      %v1938 = vpop.f32.mrb[0].mxu0
      %v1939 = vadd.f32 %v1830, %v1938
      %v1940 = vpop.f32.mrb[0].mxu0
      %v1941 = vpop.f32.mrb[0].mxu0
      %v1942 = vadd.f32 %v1830, %v1941
      %v1943 = vpop.f32.mrb[0].mxu0
      %1944 = vmatprep.mubr.bf16.mxu0 0
      %1945 = vmatmul.mubr.bf16.gmra.mrb[0].mxu0 %v1795
      %v1946 = vpop.f32.mrb[0].mxu0
      %v1947 = vadd.f32 %v1830, %v1946
      %v1948 = vpop.f32.mrb[0].mxu0
      %v1949 = vpop.f32.mrb[0].mxu0
      %v1950 = vadd.f32 %v1830, %v1949
      %v1951 = vpop.f32.mrb[0].mxu0
      %1952 = vmatprep.mubr.bf16.mxu0 0
      %1953 = vmatmul.mubr.bf16.gmra.mrb[0].mxu0 %v1796
      %v1954 = vpop.f32.mrb[0].mxu0
      %v1955 = vadd.f32 %v1830, %v1954
      %v1956 = vpop.f32.mrb[0].mxu0
      %v1957 = vpop.f32.mrb[0].mxu0
      %v1958 = vadd.f32 %v1830, %v1957
      %v1959 = vpop.f32.mrb[0].mxu0
      %1960 = vmatprep.mubr.bf16.mxu0 0
      %1961 = vmatmul.mubr.bf16.gmra.mrb[0].mxu0 %v1797
      %v1962 = vpop.f32.mrb[0].mxu0
      %v1963 = vadd.f32 %v1830, %v1962
      %v1964 = vpop.f32.mrb[0].mxu0
      %v1965 = vpop.f32.mrb[0].mxu0
      %v1966 = vadd.f32 %v1830, %v1965
      %v1967 = vpop.f32.mrb[0].mxu0
      %1968 = vmatprep.mubr.bf16.mxu0 0
      %1969 = vmatmul.mubr.bf16.gmra.mrb[0].mxu0 %v1798
      %v1970 = vpop.f32.mrb[0].mxu0
      %v1971 = vadd.f32 %v1830, %v1970
      %v1972 = vpop.f32.mrb[0].mxu0
      %v1973 = vpop.f32.mrb[0].mxu0
      %v1974 = vadd.f32 %v1830, %v1973
      %v1975 = vpop.f32.mrb[0].mxu0
      %1976 = vmatprep.mubr.bf16.mxu0 0
      %1977 = vmatmul.mubr.bf16.gmra.mrb[0].mxu0 %v1799
      %v1978 = vpop.f32.mrb[0].mxu0
      %v1979 = vadd.f32 %v1830, %v1978
      %v1980 = vpop.f32.mrb[0].mxu0
      %v1981 = vpop.f32.mrb[0].mxu0
      %v1982 = vadd.f32 %v1830, %v1981
      %v1983 = vpop.f32.mrb[0].mxu0
      %1984 = vmatprep.mubr.bf16.mxu0 0
      %1985 = vmatmul.mubr.bf16.gmra.mrb[0].mxu0 %v1800
      %v1986 = vpop.f32.mrb[0].mxu0
      %v1987 = vadd.f32 %v1830, %v1986
      %v1988 = vpop.f32.mrb[0].mxu0
      %v1989 = vpop.f32.mrb[0].mxu0
      %v1990 = vadd.f32 %v1830, %v1989
      %v1991 = vpop.f32.mrb[0].mxu0
      %1992 = vmatprep.mubr.bf16.mxu0 0
      %1993 = vmatmul.mubr.bf16.gmra.mrb[0].mxu0 %v1801
      %v1994 = vpop.f32.mrb[0].mxu0
      %v1995 = vadd.f32 %v1830, %v1994
      %v1996 = vpop.f32.mrb[0].mxu0
      %v1997 = vpop.f32.mrb[0].mxu0
      %v1998 = vadd.f32 %v1830, %v1997
      %v1999 = vpop.f32.mrb[0].mxu0
      %2000 = vmatprep.mubr.bf16.mxu0 0
      %2001 = vmatmul.mubr.bf16.gmra.mrb[0].mxu0 %v1802
      %v2002 = vpop.f32.mrb[0].mxu0
      %v2003 = vadd.f32 %v1830, %v2002
      %v2004 = vpop.f32.mrb[0].mxu0
      %v2005 = vpop.f32.mrb[0].mxu0
      %v2006 = vadd.f32 %v1830, %v2005
      %v2007 = vpop.f32.mrb[0].mxu0
      %2008 = vmatprep.mubr.bf16.mxu0 0
      %2009 = vmatmul.mubr.bf16.gmra.mrb[0].mxu0 %v1803
      %v2010 = vpop.f32.mrb[0].mxu0
      %v2011 = vadd.f32 %v1830, %v2010
      %v2012 = vpop.f32.mrb[0].mxu0
      %v2013 = vpop.f32.mrb[0].mxu0
      %v2014 = vadd.f32 %v1830, %v2013
      %v2015 = vpop.f32.mrb[0].mxu0
      %2016 = vmatprep.mubr.bf16.mxu0 0
      %2017 = vmatmul.mubr.bf16.gmra.mrb[0].mxu0 %v1804
      %v2018 = vpop.f32.mrb[0].mxu0
      %v2019 = vadd.f32 %v1830, %v2018
      %v2020 = vpop.f32.mrb[0].mxu0
      %v2021 = vpop.f32.mrb[0].mxu0
      %v2022 = vadd.f32 %v1830, %v2021
      %v2023 = vpop.f32.mrb[0].mxu0
      %2024 = vmatprep.mubr.bf16.mxu0 0
      %2025 = vmatmul.mubr.bf16.gmra.mrb[0].mxu0 %v1805
      %v2026 = vpop.f32.mrb[0].mxu0
      %v2027 = vadd.f32 %v1830, %v2026
      %v2028 = vpop.f32.mrb[0].mxu0
      %v2029 = vpop.f32.mrb[0].mxu0
      %v2030 = vadd.f32 %v1830, %v2029
      %v2031 = vpop.f32.mrb[0].mxu0
      %2032 = vmatprep.mubr.bf16.mxu0 0
      %2033 = vmatmul.mubr.bf16.gmra.mrb[0].mxu0 %v1806
      %v2034 = vpop.f32.mrb[0].mxu0
      %v2035 = vadd.f32 %v1830, %v2034
      %v2036 = vpop.f32.mrb[0].mxu0
      %v2037 = vpop.f32.mrb[0].mxu0
      %v2038 = vadd.f32 %v1830, %v2037
      %v2039 = vpop.f32.mrb[0].mxu0
      %2040 = vdwg.mxu0
      %v2041 = vmul.f32 %v1915, 0.2
      %v2042 = vmul.f32 %v1918, 0.2
      %v2043 = vmul.f32 %v1923, 0.2
      %v2044 = vmul.f32 %v1926, 0.2
      %v2045 = vmul.f32 %v1931, 0.2
      %v2046 = vmul.f32 %v1934, 0.2
      %v2047 = vmul.f32 %v1939, 0.2
      %v2048 = vmul.f32 %v1942, 0.2
      %v2049 = vmul.f32 %v1947, 0.2
      %v2050 = vmul.f32 %v1950, 0.2
      %v2051 = vmul.f32 %v1955, 0.2
      %v2052 = vmul.f32 %v1958, 0.2
      %v2053 = vmul.f32 %v1963, 0.2
      %v2054 = vmul.f32 %v1966, 0.2
      %v2055 = vmul.f32 %v1971, 0.2
      %v2056 = vmul.f32 %v1974, 0.2
      %v2057 = vmul.f32 %v1979, 0.2
      %v2058 = vmul.f32 %v1982, 0.2
      %v2059 = vmul.f32 %v1987, 0.2
      %v2060 = vmul.f32 %v1990, 0.2
      %v2061 = vmul.f32 %v1995, 0.2
      %v2062 = vmul.f32 %v1998, 0.2
      %v2063 = vmul.f32 %v2003, 0.2
      %v2064 = vmul.f32 %v2006, 0.2
      %v2065 = vmul.f32 %v2011, 0.2
      %v2066 = vmul.f32 %v2014, 0.2
      %v2067 = vmul.f32 %v2019, 0.2
      %v2068 = vmul.f32 %v2022, 0.2
      %v2069 = vmul.f32 %v2027, 0.2
      %v2070 = vmul.f32 %v2030, 0.2
      %v2071 = vmul.f32 %v2035, 0.2
      %v2072 = vmul.f32 %v2038, 0.2
      %v2073 = vmax.f32 %v1915, %v2041
      %v2074 = vmax.f32 %v1918, %v2042
      %v2075 = vmax.f32 %v1923, %v2043
      %v2076 = vmax.f32 %v1926, %v2044
      %v2077 = vmax.f32 %v1931, %v2045
      %v2078 = vmax.f32 %v1934, %v2046
      %v2079 = vmax.f32 %v1939, %v2047
      %v2080 = vmax.f32 %v1942, %v2048
      %v2081 = vmax.f32 %v1947, %v2049
      %v2082 = vmax.f32 %v1950, %v2050
      %v2083 = vmax.f32 %v1955, %v2051
      %v2084 = vmax.f32 %v1958, %v2052
      %v2085 = vmax.f32 %v1963, %v2053
      %v2086 = vmax.f32 %v1966, %v2054
      %v2087 = vmax.f32 %v1971, %v2055
      %v2088 = vmax.f32 %v1974, %v2056
      %v2089 = vmax.f32 %v1979, %v2057
      %v2090 = vmax.f32 %v1982, %v2058
      %v2091 = vmax.f32 %v1987, %v2059
      %v2092 = vmax.f32 %v1990, %v2060
      %v2093 = vmax.f32 %v1995, %v2061
      %v2094 = vmax.f32 %v1998, %v2062
      %v2095 = vmax.f32 %v2003, %v2063
      %v2096 = vmax.f32 %v2006, %v2064
      %v2097 = vmax.f32 %v2011, %v2065
      %v2098 = vmax.f32 %v2014, %v2066
      %v2099 = vmax.f32 %v2019, %v2067
      %v2100 = vmax.f32 %v2022, %v2068
      %v2101 = vmax.f32 %v2027, %v2069
      %v2102 = vmax.f32 %v2030, %v2070
      %v2103 = vmax.f32 %v2035, %v2071
      %v2104 = vmax.f32 %v2038, %v2072
      %2105 = vst [vmem:[%s199] sm:$0xff] %v2073
      %2106 = vst [vmem:[%s199 + $0x8] sm:$0xff] %v2074
      %2107 = vst [vmem:[%s199 + $0x10] sm:$0xff] %v2075
      %2108 = vst [vmem:[%s199 + $0x18] sm:$0xff] %v2076
      %2109 = vst [vmem:[%s199 + $0x20] sm:$0xff] %v2077
      %2110 = vst [vmem:[%s199 + $0x28] sm:$0xff] %v2078
      %2111 = vst [vmem:[%s199 + $0x30] sm:$0xff] %v2079
      %2112 = vst [vmem:[%s199 + $0x38] sm:$0xff] %v2080
      %2113 = vst [vmem:[%s199 + $0x40] sm:$0xff] %v2081
      %2114 = vst [vmem:[%s199 + $0x48] sm:$0xff] %v2082
      %2115 = vst [vmem:[%s199 + $0x50] sm:$0xff] %v2083
      %2116 = vst [vmem:[%s199 + $0x58] sm:$0xff] %v2084
      %2117 = vst [vmem:[%s199 + $0x60] sm:$0xff] %v2085
      %2118 = vst [vmem:[%s199 + $0x68] sm:$0xff] %v2086
      %2119 = vst [vmem:[%s199 + $0x70] sm:$0xff] %v2087
      %2120 = vst [vmem:[%s199 + $0x78] sm:$0xff] %v2088
      %2121 = vst [vmem:[%s199 + $0x80] sm:$0xff] %v2089
      %2122 = vst [vmem:[%s199 + $0x88] sm:$0xff] %v2090
      %2123 = vst [vmem:[%s199 + $0x90] sm:$0xff] %v2091
      %2124 = vst [vmem:[%s199 + $0x98] sm:$0xff] %v2092
      %2125 = vst [vmem:[%s199 + $0xa0] sm:$0xff] %v2093
      %2126 = vst [vmem:[%s199 + $0xa8] sm:$0xff] %v2094
      %2127 = vst [vmem:[%s199 + $0xb0] sm:$0xff] %v2095
      %2128 = vst [vmem:[%s199 + $0xb8] sm:$0xff] %v2096
      %2129 = vst [vmem:[%s199 + $0xc0] sm:$0xff] %v2097
      %2130 = vst [vmem:[%s199 + $0xc8] sm:$0xff] %v2098
      %2131 = vst [vmem:[%s199 + $0xd0] sm:$0xff] %v2099
      %2132 = vst [vmem:[%s199 + $0xd8] sm:$0xff] %v2100
      %2133 = vst [vmem:[%s199 + $0xe0] sm:$0xff] %v2101
      %2134 = vst [vmem:[%s199 + $0xe8] sm:$0xff] %v2102
      %2135 = vst [vmem:[%s199 + $0xf0] sm:$0xff] %v2103
      %2136 = vst [vmem:[%s199 + $0xf8] sm:$0xff] %v2104
      %s2137 = smul.u32 32, %s15
      %p2138 = scmp.lt.s32.totalorder %s2137, 63
      %s2139 = scalar_select %p2138, %s2137, 63
      %s2140 = smul.addr %s2139, 8
      %s2141 = scalar_lea.vmem %s4, %s2140
      // Predicated region
      $region37: #{blur_embedding_fwd.1} parent=35 // pred_check
        %p2142 = pneg %p122
      $region38: #{blur_embedding_fwd.1} parent=35 // pred_check_branch
        %2144 = sbr.rel (%p2142) target = $region40
      $region39: #{blur_embedding_fwd.1} parent=35 // pred_region
        %s2145 = smul.u32 32, %s15
      $region40: #{blur_embedding_fwd.1} parent=35 // pred_fallthru
        _
    $region36: #{blur_embedding_fwd.1} parent=5 // pred_fallthru
      _
    %p2146 = scmp.le.s32.totalorder 2, %s10
    // Predicated region
    $region41: #{blur_embedding_fwd.1} parent=5 // pred_check
      %p2147 = pneg %p2146
    $region42: #{blur_embedding_fwd.1} parent=5 // pred_check_branch
      %2149 = sbr.rel (%p2147) target = $region44
    $region43: #{blur_embedding_fwd.1} parent=5 // pred_region
      %s2150 = ssub.s32 %s10, 2
      // Predicated region
      $region45: #{blur_embedding_fwd.1} parent=43 // pred_check
        %p2151 = pneg %p128
      $region46: #{blur_embedding_fwd.1} parent=43 // pred_check_branch
        %2153 = sbr.rel (%p2151) target = $region48
      $region47: #{blur_embedding_fwd.1} parent=43 // pred_region
        %s2154 = smul.u32 32, %s16
        %p2155 = scmp.lt.s32.totalorder %s2154, 63
        %s2156 = scalar_select %p2155, %s2154, 63
        %s2157 = smul.addr %s2156, 8
        %s2158 = scalar_lea.vmem %s4, %s2157
      $region48: #{blur_embedding_fwd.1} parent=43 // pred_fallthru
        _
    $region44: #{blur_embedding_fwd.1} parent=5 // pred_fallthru
      _
  $region6: #{blur_embedding_fwd.1} parent=0 // loop_footer
    %s14 = sadd.s32 1, %s10
  $region7: #{blur_embedding_fwd.1} parent=0 // loop_footer_branch
    %9 = sbr.rel target = $region3
  $region8: #{blur_embedding_fwd.1} parent=0 // loop_exit
    _

</llo_original>
